<compile_context>
chip_gen: v5e
topology: v5e:2x2
jax: 0.10.0
libtpu: 0.0.40
codegen_flags: <defaults>
</compile_context>

<pallas_src>
import math

import jax
import jax.numpy as jnp
import numpy as np
from jax.experimental import pallas as pl
from jax.experimental.pallas import tpu as pltpu


# ----------------------------------------------------------------------------
# Fused Pallas kernel (one batch element per grid step)
# ----------------------------------------------------------------------------

def _adaattn_block(content, style, ckey, skey, cmean, crstd, wf, wg, wh, b_all):
    """AdaAttN for one batch element, (C, T) layout throughout.

    content: (C, Tc)  style: (C, Ts)  ckey: (Ck, Tc)  skey: (Ck, Ts)
    cmean/crstd: (C, 1) precomputed mean / rsqrt(var+eps) of `content` over Tc
    wf/wg: (Ck, Ck)  wh: (C, C)  b_all: (2*Ck + C, 1) stacked [bf; bg; bh]
    returns (C, Tc)
    """
    Ck = wf.shape[0]
    C = wh.shape[0]
    bf = b_all[0:Ck]
    bg = b_all[Ck:2 * Ck]
    bh = b_all[2 * Ck:2 * Ck + C]

    # 1x1 Conv1d == channel matmul (MXU). Kept f32 (feeds the softmax path).
    F = jnp.dot(wf, ckey, preferred_element_type=jnp.float32) + bf        # (Ck, Tc)
    G = jnp.dot(wg, skey, preferred_element_type=jnp.float32) + bg        # (Ck, Ts)
    H = jnp.dot(wh, style, preferred_element_type=jnp.float32) + bh       # (C,  Ts)

    # A[s, t] = sum_c G[c, s] F[c, t]  ( == S[t, s] of the original layout ).
    # Contract dim 0 of BOTH operands -- no G.T materialization. Softmax over
    # the style axis (axis 0); downstream moments then land directly in
    # (C, Tc) with no output transposes.
    A = jax.lax.dot_general(G, F, dimension_numbers=(((0,), (0,)), ((), ())),
                            preferred_element_type=jnp.float32)           # (Ts, Tc)
    A = jnp.exp(A - jnp.max(A, axis=0, keepdims=True))
    A = A * pl.reciprocal(jnp.sum(A, axis=0, keepdims=True), approx=False)

    # One fat MXU pass for both moments: [H; H*H] @ A, operands in bf16
    # (flash-attention style), f32 accumulation.
    HH = jnp.concatenate([H, H * H], axis=0).astype(jnp.bfloat16)         # (2C, Ts)
    M = jnp.dot(HH, A.astype(jnp.bfloat16),
                preferred_element_type=jnp.float32)                       # (2C, Tc)
    mean = M[:C]                                                          # (C, Tc)
    mom2 = M[C:]                                                          # (C, Tc)
    std = jnp.sqrt(jnp.maximum(mom2 - mean * mean, 0.0))

    # mean_variance_norm(content) with precomputed per-(B,C) statistics.
    cnorm = (content - cmean) * crstd

    return std * cnorm + mean


def transformer_kernel(c4_ref, s4_ref, ck4_ref, sk4_ref, cm4_ref, cr4_ref,
                       c5_ref, s5_ref, ck5_ref, sk5_ref, cm5_ref, cr5_ref,
                       wf4_ref, wg4_ref, wh4_ref, b4_ref,
                       wf5_ref, wg5_ref, wh5_ref, b5_ref,
                       u_ref, wm_ref, bm_ref,
                       out_ref):
    a4 = _adaattn_block(c4_ref[0], s4_ref[0], ck4_ref[0], sk4_ref[0],
                        cm4_ref[0], cr4_ref[0],
                        wf4_ref[...], wg4_ref[...], wh4_ref[...],
                        b4_ref[...])                                      # (C, T4)
    a5 = _adaattn_block(c5_ref[0], s5_ref[0], ck5_ref[0], sk5_ref[0],
                        cm5_ref[0], cr5_ref[0],
                        wf5_ref[...], wg5_ref[...], wh5_ref[...],
                        b5_ref[...])                                      # (C, T5)

    # a4 + linear upsample x2 (align_corners=True) as a bf16 matmul, f32 acc.
    # TODO(synk): at production T replace the dense (99.95%-zero) U with a
    # per-lane-weighted interleave lerp to save VMEM + MXU cycles.
    x = a4 + jnp.dot(a5.astype(jnp.bfloat16), u_ref[...],
                     preferred_element_type=jnp.float32)                  # (C, T4)

    T4 = x.shape[1]
    xb = x.astype(jnp.bfloat16)
    # ReflectionPad1d(1) + k=3 conv as three accumulated (C,C)x(C,T4) matmuls
    # against shifted views -- no (C,T4+2) pad buffer, no (3C,T4) staging.
    # x_left[:, t]  = x[:, t-1] (t>0),  x[:, 1]    at t=0      (reflect)
    # x_right[:, t] = x[:, t+1] (t<T-1), x[:, T-2] at t=T4-1   (reflect)
    x_left = jnp.concatenate([xb[:, 1:2], xb[:, :T4 - 1]], axis=1)        # (C, T4)
    x_right = jnp.concatenate([xb[:, 1:], xb[:, T4 - 2:T4 - 1]], axis=1)  # (C, T4)

    wm = wm_ref[...]                                                      # (3, C, C) bf16
    out = (jnp.dot(wm[0], x_left, preferred_element_type=jnp.float32)
           + jnp.dot(wm[1], xb, preferred_element_type=jnp.float32)
           + jnp.dot(wm[2], x_right, preferred_element_type=jnp.float32)
           + bm_ref[...])                                                 # (C, T4)
    out_ref[0] = out


# ----------------------------------------------------------------------------
# pallas_call wrapper
# ----------------------------------------------------------------------------

def _batch_spec(shape):
    nd = len(shape)
    return pl.BlockSpec((1,) + tuple(shape[1:]),
                        lambda b, _nd=nd: (b,) + (0,) * (_nd - 1))


def _full_spec(shape):
    nd = len(shape)
    return pl.BlockSpec(tuple(shape), lambda b, _nd=nd: (0,) * _nd)


def _mvn_stats(x):
    """Per-(B,C) mean and rsqrt(unbiased var + 1e-5) over the last axis."""
    T = x.shape[-1]
    m = jnp.mean(x, axis=-1, keepdims=True)
    v = jnp.sum((x - m) ** 2, axis=-1, keepdims=True) / (T - 1) + 1e-5
    return m, jax.lax.rsqrt(v)


def transformer_forward(c4, s4, c5, s5, ck4, sk4, ck5, sk5, params):
    B, C, T4 = c4.shape
    T5 = c5.shape[-1]
    assert T4 == 2 * T5, "upsample x2 requires T4 == 2 * T5"

    # Tiny XLA pre-pass: mean_variance_norm statistics (decoupled from any
    # future Tc tiling inside the kernel).
    cm4, cr4 = _mvn_stats(c4)
    cm5, cr5 = _mvn_stats(c5)

    attn4 = tuple(params["attn4"])     # (wf, wg, wh, stacked_bias)
    attn5 = tuple(params["attn5"])
    U = params["upsample"]             # (T5, T4) bf16, host-built constant
    Wm, bm = params["merge"]           # (3, C, C) bf16, (C, 1) f32

    batched = (c4, s4, ck4, sk4, cm4, cr4, c5, s5, ck5, sk5, cm5, cr5)
    full = attn4 + attn5 + (U, Wm, bm)
    in_specs = ([_batch_spec(a.shape) for a in batched]
                + [_full_spec(a.shape) for a in full])

    return pl.pallas_call(
        transformer_kernel,
        out_shape=jax.ShapeDtypeStruct((B, C, T4), jnp.float32),
        grid=(B,),
        in_specs=in_specs,
        out_specs=_batch_spec((B, C, T4)),
        compiler_params=pltpu.CompilerParams(
            dimension_semantics=("parallel",),     # v7x: one batch elem per TC
            vmem_limit_bytes=48 * 1024 * 1024),
    )(*batched, *full)


def linear_upsample_matrix(L_in, L_out):
    """Interpolation matrix U (L_in, L_out) for mode='linear', align_corners=True."""
    i = np.arange(L_out)
    src = i * (L_in - 1) / (L_out - 1)
    lo = np.floor(src).astype(np.int64)
    hi = np.minimum(lo + 1, L_in - 1)
    frac = (src - lo).astype(np.float32)
    U = np.zeros((L_in, L_out), dtype=np.float32)
    U[lo, i] += 1.0 - frac
    U[hi, i] += frac
    return jnp.asarray(U)


# ----------------------------------------------------------------------------
# Parameter init (deterministic, PyTorch-Conv1d-style uniform bounds)
# ----------------------------------------------------------------------------

def conv1d_params(key, out_c, in_c, ksize):
    k1, k2 = jax.random.split(key)
    bound = 1.0 / math.sqrt(in_c * ksize)
    w = jax.random.uniform(k1, (out_c, in_c, ksize), jnp.float32, -bound, bound)
    b = jax.random.uniform(k2, (out_c,), jnp.float32, -bound, bound)
    return w, b


def make_adaattn_params(key, in_planes, key_planes):
    kf, kg, kh = jax.random.split(key, 3)
    wf, bf = conv1d_params(kf, key_planes, key_planes, 1)
    wg, bg = conv1d_params(kg, key_planes, key_planes, 1)
    wh, bh = conv1d_params(kh, in_planes, in_planes, 1)
    return (wf[:, :, 0], bf[:, None], wg[:, :, 0], bg[:, None],
            wh[:, :, 0], bh[:, None])


def pack_attn_params(p):
    """Kernel-side packing: weights f32, biases stacked into one (2Ck+C,1)."""
    wf, bf, wg, bg, wh, bh = p
    return (wf, wg, wh, jnp.concatenate([bf, bg, bh], axis=0))


# ----------------------------------------------------------------------------
# Pure-JAX reference (for verification, full f32)
# ----------------------------------------------------------------------------

def adaattn_ref(content, style, ckey, skey, params):
    wf, bf, wg, bg, wh, bh = params
    F = jnp.einsum("oi,bit->bot", wf, ckey) + bf[None]
    G = jnp.einsum("oi,bit->bot", wg, skey) + bg[None]
    H = jnp.einsum("oi,bit->bot", wh, style) + bh[None]
    S = jax.nn.softmax(jnp.einsum("bct,bcs->bts", F, G), axis=-1)
    Ht = jnp.transpose(H, (0, 2, 1))
    mean = jnp.einsum("bts,bsc->btc", S, Ht)
    mom2 = jnp.einsum("bts,bsc->btc", S, Ht * Ht)
    std = jnp.sqrt(jnp.maximum(mom2 - mean ** 2, 0.0))
    mean = jnp.transpose(mean, (0, 2, 1))
    std = jnp.transpose(std, (0, 2, 1))
    Tc = content.shape[-1]
    cm = jnp.mean(content, axis=-1, keepdims=True)
    cv = jnp.sum((content - cm) ** 2, axis=-1, keepdims=True) / (Tc - 1) + 1e-5
    cn = (content - cm) / jnp.sqrt(cv)
    return std * cn + mean


def transformer_ref(c4, s4, c5, s5, ck4, sk4, ck5, sk5, attn4, attn5, w3, b3):
    a4 = adaattn_ref(c4, s4, ck4, sk4, attn4)
    a5 = adaattn_ref(c5, s5, ck5, sk5, attn5)
    U = linear_upsample_matrix(a5.shape[-1], 2 * a5.shape[-1])
    x = a4 + jnp.einsum("bct,ts->bcs", a5, U)
    xp = jnp.pad(x, ((0, 0), (0, 0), (1, 1)), mode="reflect")
    return (jnp.einsum("oc,bct->bot", w3[:, :, 0], xp[:, :, :-2])
            + jnp.einsum("oc,bct->bot", w3[:, :, 1], xp[:, :, 1:-1])
            + jnp.einsum("oc,bct->bot", w3[:, :, 2], xp[:, :, 2:])
            + b3[None, :, None])


# ----------------------------------------------------------------------------
# Main
# ----------------------------------------------------------------------------

if __name__ == "__main__":
    key = jax.random.PRNGKey(0)
    B, C = 2, 32            # in_planes = 32
    CK = 32                 # key_planes = 32, shallow_layer = False
    T_c5, T_s5 = 8, 8
    T_c4, T_s4 = 16, 16     # T_c4 must equal 2 * T_c5 (upsample x2 then add)

    keys = jax.random.split(key, 12)
    c4 = jax.random.normal(keys[0], (B, C, T_c4), jnp.float32)
    s4 = jax.random.normal(keys[1], (B, C, T_s4), jnp.float32)
    c5 = jax.random.normal(keys[2], (B, C, T_c5), jnp.float32)
    s5 = jax.random.normal(keys[3], (B, C, T_s5), jnp.float32)
    ck4 = jax.random.normal(keys[4], (B, CK, T_c4), jnp.float32)
    sk4 = jax.random.normal(keys[5], (B, CK, T_s4), jnp.float32)
    ck5 = jax.random.normal(keys[6], (B, CK, T_c5), jnp.float32)
    sk5 = jax.random.normal(keys[7], (B, CK, T_s5), jnp.float32)

    attn4 = make_adaattn_params(keys[8], C, CK)
    attn5 = make_adaattn_params(keys[9], C, CK)
    w_merge, b_merge = conv1d_params(keys[10], C, C, 3)

    # Host-side constants built once: packed attention params, bf16 upsample
    # matrix, merge-conv weight as (3, C, C) bf16 taps.
    params = {
        "attn4": pack_attn_params(attn4),
        "attn5": pack_attn_params(attn5),
        "upsample": linear_upsample_matrix(T_c5, T_c4).astype(jnp.bfloat16),
        "merge": (jnp.transpose(w_merge, (2, 0, 1)).astype(jnp.bfloat16),
                  b_merge[:, None]),
    }

    fwd = jax.jit(transformer_forward)
    out = jax.block_until_ready(fwd(c4, s4, c5, s5, ck4, sk4, ck5, sk5, params))
    assert out.shape == (B, C, T_c4) and out.dtype == jnp.float32

    ref = jax.block_until_ready(
        transformer_ref(c4, s4, c5, s5, ck4, sk4, ck5, sk5,
                        attn4, attn5, w_merge, b_merge))
    # Tolerance relaxed from 1e-2 -> 2e-2: the kernel intentionally runs the
    # moments / upsample / merge-conv matmuls with bf16 operands (f32 acc)
    # per the perf review, vs the full-f32 reference.
    np.testing.assert_allclose(np.asarray(out), np.asarray(ref),
                               rtol=2e-2, atol=2e-2)

    print("KERNEL_OK")
</pallas_src>

<mosaic_0001>
module attributes {stable_mosaic.version = 11 : i64} {
  func.func @transformer_kernel(%arg0: i32, %arg1: memref<1x32x16xf32, #tpu.memory_space<vmem>>, %arg2: memref<1x32x16xf32, #tpu.memory_space<vmem>>, %arg3: memref<1x32x16xf32, #tpu.memory_space<vmem>>, %arg4: memref<1x32x16xf32, #tpu.memory_space<vmem>>, %arg5: memref<1x32x1xf32, #tpu.memory_space<vmem>>, %arg6: memref<1x32x1xf32, #tpu.memory_space<vmem>>, %arg7: memref<1x32x8xf32, #tpu.memory_space<vmem>>, %arg8: memref<1x32x8xf32, #tpu.memory_space<vmem>>, %arg9: memref<1x32x8xf32, #tpu.memory_space<vmem>>, %arg10: memref<1x32x8xf32, #tpu.memory_space<vmem>>, %arg11: memref<1x32x1xf32, #tpu.memory_space<vmem>>, %arg12: memref<1x32x1xf32, #tpu.memory_space<vmem>>, %arg13: memref<32x32xf32, #tpu.memory_space<vmem>>, %arg14: memref<32x32xf32, #tpu.memory_space<vmem>>, %arg15: memref<32x32xf32, #tpu.memory_space<vmem>>, %arg16: memref<96x1xf32, #tpu.memory_space<vmem>>, %arg17: memref<32x32xf32, #tpu.memory_space<vmem>>, %arg18: memref<32x32xf32, #tpu.memory_space<vmem>>, %arg19: memref<32x32xf32, #tpu.memory_space<vmem>>, %arg20: memref<96x1xf32, #tpu.memory_space<vmem>>, %arg21: memref<8x16xbf16, #tpu.memory_space<vmem>>, %arg22: memref<3x32x32xbf16, #tpu.memory_space<vmem>>, %arg23: memref<32x1xf32, #tpu.memory_space<vmem>>, %arg24: memref<1x32x16xf32, #tpu.memory_space<vmem>>) attributes {dimension_semantics = [#tpu.dimension_semantics<parallel>], iteration_bounds = array<i64: 2>, scalar_prefetch = 0 : i64, scratch_operands = 0 : i64, tpu.core_type = #tpu.core_type<tc>, window_params = [{transform_indices = @transform_0, window_bounds = array<i64: 1, 32, 16>}, {transform_indices = @transform_1, window_bounds = array<i64: 1, 32, 16>}, {transform_indices = @transform_2, window_bounds = array<i64: 1, 32, 16>}, {transform_indices = @transform_3, window_bounds = array<i64: 1, 32, 16>}, {transform_indices = @transform_4, window_bounds = array<i64: 1, 32, 1>}, {transform_indices = @transform_5, window_bounds = array<i64: 1, 32, 1>}, {transform_indices = @transform_6, window_bounds = array<i64: 1, 32, 8>}, {transform_indices = @transform_7, window_bounds = array<i64: 1, 32, 8>}, {transform_indices = @transform_8, window_bounds = array<i64: 1, 32, 8>}, {transform_indices = @transform_9, window_bounds = array<i64: 1, 32, 8>}, {transform_indices = @transform_10, window_bounds = array<i64: 1, 32, 1>}, {transform_indices = @transform_11, window_bounds = array<i64: 1, 32, 1>}, {pipeline_mode = #tpu.pipeline_mode<synchronous>, transform_indices = @transform_12, window_bounds = array<i64: 32, 32>}, {pipeline_mode = #tpu.pipeline_mode<synchronous>, transform_indices = @transform_13, window_bounds = array<i64: 32, 32>}, {pipeline_mode = #tpu.pipeline_mode<synchronous>, transform_indices = @transform_14, window_bounds = array<i64: 32, 32>}, {pipeline_mode = #tpu.pipeline_mode<synchronous>, transform_indices = @transform_15, window_bounds = array<i64: 96, 1>}, {pipeline_mode = #tpu.pipeline_mode<synchronous>, transform_indices = @transform_16, window_bounds = array<i64: 32, 32>}, {pipeline_mode = #tpu.pipeline_mode<synchronous>, transform_indices = @transform_17, window_bounds = array<i64: 32, 32>}, {pipeline_mode = #tpu.pipeline_mode<synchronous>, transform_indices = @transform_18, window_bounds = array<i64: 32, 32>}, {pipeline_mode = #tpu.pipeline_mode<synchronous>, transform_indices = @transform_19, window_bounds = array<i64: 96, 1>}, {pipeline_mode = #tpu.pipeline_mode<synchronous>, transform_indices = @transform_20, window_bounds = array<i64: 8, 16>}, {pipeline_mode = #tpu.pipeline_mode<synchronous>, transform_indices = @transform_21, window_bounds = array<i64: 3, 32, 32>}, {pipeline_mode = #tpu.pipeline_mode<synchronous>, transform_indices = @transform_22, window_bounds = array<i64: 32, 1>}, {transform_indices = @transform_23, window_bounds = array<i64: 1, 32, 16>}]} {
    %c0 = arith.constant 0 : index
    %c0_0 = arith.constant 0 : index
    %c0_1 = arith.constant 0 : index
    %0 = vector.load %arg1[%c0, %c0_0, %c0_1] : memref<1x32x16xf32, #tpu.memory_space<vmem>>, vector<1x32x16xf32>
    %1 = vector.shape_cast %0 : vector<1x32x16xf32> to vector<32x16xf32>
    %c0_2 = arith.constant 0 : index
    %c0_3 = arith.constant 0 : index
    %c0_4 = arith.constant 0 : index
    %2 = vector.load %arg2[%c0_2, %c0_3, %c0_4] : memref<1x32x16xf32, #tpu.memory_space<vmem>>, vector<1x32x16xf32>
    %3 = vector.shape_cast %2 : vector<1x32x16xf32> to vector<32x16xf32>
    %c0_5 = arith.constant 0 : index
    %c0_6 = arith.constant 0 : index
    %c0_7 = arith.constant 0 : index
    %4 = vector.load %arg3[%c0_5, %c0_6, %c0_7] : memref<1x32x16xf32, #tpu.memory_space<vmem>>, vector<1x32x16xf32>
    %5 = vector.shape_cast %4 : vector<1x32x16xf32> to vector<32x16xf32>
    %c0_8 = arith.constant 0 : index
    %c0_9 = arith.constant 0 : index
    %c0_10 = arith.constant 0 : index
    %6 = vector.load %arg4[%c0_8, %c0_9, %c0_10] : memref<1x32x16xf32, #tpu.memory_space<vmem>>, vector<1x32x16xf32>
    %7 = vector.shape_cast %6 : vector<1x32x16xf32> to vector<32x16xf32>
    %c0_11 = arith.constant 0 : index
    %c0_12 = arith.constant 0 : index
    %c0_13 = arith.constant 0 : index
    %8 = vector.load %arg5[%c0_11, %c0_12, %c0_13] : memref<1x32x1xf32, #tpu.memory_space<vmem>>, vector<1x32x1xf32>
    %9 = vector.shape_cast %8 : vector<1x32x1xf32> to vector<32x1xf32>
    %c0_14 = arith.constant 0 : index
    %c0_15 = arith.constant 0 : index
    %c0_16 = arith.constant 0 : index
    %10 = vector.load %arg6[%c0_14, %c0_15, %c0_16] : memref<1x32x1xf32, #tpu.memory_space<vmem>>, vector<1x32x1xf32>
    %11 = vector.shape_cast %10 : vector<1x32x1xf32> to vector<32x1xf32>
    %c0_17 = arith.constant 0 : index
    %c0_18 = arith.constant 0 : index
    %12 = vector.load %arg13[%c0_17, %c0_18] : memref<32x32xf32, #tpu.memory_space<vmem>>, vector<32x32xf32>
    %c0_19 = arith.constant 0 : index
    %c0_20 = arith.constant 0 : index
    %13 = vector.load %arg14[%c0_19, %c0_20] : memref<32x32xf32, #tpu.memory_space<vmem>>, vector<32x32xf32>
    %c0_21 = arith.constant 0 : index
    %c0_22 = arith.constant 0 : index
    %14 = vector.load %arg15[%c0_21, %c0_22] : memref<32x32xf32, #tpu.memory_space<vmem>>, vector<32x32xf32>
    %c0_23 = arith.constant 0 : index
    %c0_24 = arith.constant 0 : index
    %15 = vector.load %arg16[%c0_23, %c0_24] : memref<96x1xf32, #tpu.memory_space<vmem>>, vector<96x1xf32>
    %16 = vector.extract_strided_slice %15 {offsets = [0, 0], sizes = [32, 1], strides = [1, 1]} : vector<96x1xf32> to vector<32x1xf32>
    %17 = vector.extract_strided_slice %15 {offsets = [32, 0], sizes = [32, 1], strides = [1, 1]} : vector<96x1xf32> to vector<32x1xf32>
    %18 = vector.extract_strided_slice %15 {offsets = [64, 0], sizes = [32, 1], strides = [1, 1]} : vector<96x1xf32> to vector<32x1xf32>
    %cst = arith.constant dense<0.000000e+00> : vector<32x16xf32>
    %19 = tpu.matmul %12, %5, %cst {dimension_numbers = #tpu.dot_dimension_numbers<[1], [0], [0], [1], [0, 0, 1, 1], [], []>} : vector<32x32xf32>, vector<32x16xf32>, vector<32x16xf32> -> vector<32x16xf32>
    %20 = vector.broadcast %16 : vector<32x1xf32> to vector<32x16xf32>
    %21 = arith.addf %19, %20 : vector<32x16xf32>
    %cst_25 = arith.constant dense<0.000000e+00> : vector<32x16xf32>
    %22 = tpu.matmul %13, %7, %cst_25 {dimension_numbers = #tpu.dot_dimension_numbers<[1], [0], [0], [1], [0, 0, 1, 1], [], []>} : vector<32x32xf32>, vector<32x16xf32>, vector<32x16xf32> -> vector<32x16xf32>
    %23 = vector.broadcast %17 : vector<32x1xf32> to vector<32x16xf32>
    %24 = arith.addf %22, %23 : vector<32x16xf32>
    %cst_26 = arith.constant dense<0.000000e+00> : vector<32x16xf32>
    %25 = tpu.matmul %14, %3, %cst_26 {dimension_numbers = #tpu.dot_dimension_numbers<[1], [0], [0], [1], [0, 0, 1, 1], [], []>} : vector<32x32xf32>, vector<32x16xf32>, vector<32x16xf32> -> vector<32x16xf32>
    %26 = vector.broadcast %18 : vector<32x1xf32> to vector<32x16xf32>
    %27 = arith.addf %25, %26 : vector<32x16xf32>
    %cst_27 = arith.constant dense<0.000000e+00> : vector<16x16xf32>
    %28 = tpu.matmul %24, %21, %cst_27 {dimension_numbers = #tpu.dot_dimension_numbers<[0], [0], [1], [1], [0, 1, 1, 1], [], []>} : vector<32x16xf32>, vector<32x16xf32>, vector<16x16xf32> -> vector<16x16xf32>
    %cst_28 = arith.constant dense<0xFF800000> : vector<16xf32>
    %29 = vector.multi_reduction <maximumf>, %28, %cst_28 [0] : vector<16x16xf32> to vector<16xf32>
    %30 = vector.shape_cast %29 : vector<16xf32> to vector<1x16xf32>
    %31 = vector.broadcast %30 : vector<1x16xf32> to vector<16x16xf32>
    %32 = arith.subf %28, %31 : vector<16x16xf32>
    %33 = math.exp %32 : vector<16x16xf32>
    %cst_29 = arith.constant dense<0.000000e+00> : vector<16xf32>
    %34 = vector.multi_reduction <add>, %33, %cst_29 [0] : vector<16x16xf32> to vector<16xf32>
    %35 = vector.shape_cast %34 : vector<16xf32> to vector<1x16xf32>
    %36 = tpu.reciprocal %35 : vector<1x16xf32> -> vector<1x16xf32>
    %37 = vector.broadcast %36 : vector<1x16xf32> to vector<16x16xf32>
    %38 = arith.mulf %33, %37 : vector<16x16xf32>
    %39 = arith.mulf %27, %27 : vector<32x16xf32>
    %40 = tpu.concatenate %27, %39 in 0 : vector<32x16xf32>, vector<32x16xf32> -> vector<64x16xf32>
    %41 = arith.truncf %40 : vector<64x16xf32> to vector<64x16xbf16>
    %42 = arith.truncf %38 : vector<16x16xf32> to vector<16x16xbf16>
    %cst_30 = arith.constant dense<0.000000e+00> : vector<64x16xf32>
    %43 = tpu.matmul %41, %42, %cst_30 {dimension_numbers = #tpu.dot_dimension_numbers<[1], [0], [0], [1], [0, 0, 1, 1], [], []>} : vector<64x16xbf16>, vector<16x16xbf16>, vector<64x16xf32> -> vector<64x16xf32>
    %44 = vector.extract_strided_slice %43 {offsets = [0, 0], sizes = [32, 16], strides = [1, 1]} : vector<64x16xf32> to vector<32x16xf32>
    %45 = vector.extract_strided_slice %43 {offsets = [32, 0], sizes = [32, 16], strides = [1, 1]} : vector<64x16xf32> to vector<32x16xf32>
    %46 = arith.mulf %44, %44 : vector<32x16xf32>
    %47 = arith.subf %45, %46 : vector<32x16xf32>
    %cst_31 = arith.constant 0.000000e+00 : f32
    %48 = vector.broadcast %cst_31 : f32 to vector<32x16xf32>
    %49 = arith.maximumf %47, %48 : vector<32x16xf32>
    %50 = math.sqrt %49 : vector<32x16xf32>
    %51 = vector.broadcast %9 : vector<32x1xf32> to vector<32x16xf32>
    %52 = arith.subf %1, %51 : vector<32x16xf32>
    %53 = vector.broadcast %11 : vector<32x1xf32> to vector<32x16xf32>
    %54 = arith.mulf %52, %53 : vector<32x16xf32>
    %55 = arith.mulf %50, %54 : vector<32x16xf32>
    %56 = arith.addf %55, %44 : vector<32x16xf32>
    %c0_32 = arith.constant 0 : index
    %c0_33 = arith.constant 0 : index
    %c0_34 = arith.constant 0 : index
    %57 = vector.load %arg7[%c0_32, %c0_33, %c0_34] : memref<1x32x8xf32, #tpu.memory_space<vmem>>, vector<1x32x8xf32>
    %58 = vector.shape_cast %57 : vector<1x32x8xf32> to vector<32x8xf32>
    %c0_35 = arith.constant 0 : index
    %c0_36 = arith.constant 0 : index
    %c0_37 = arith.constant 0 : index
    %59 = vector.load %arg8[%c0_35, %c0_36, %c0_37] : memref<1x32x8xf32, #tpu.memory_space<vmem>>, vector<1x32x8xf32>
    %60 = vector.shape_cast %59 : vector<1x32x8xf32> to vector<32x8xf32>
    %c0_38 = arith.constant 0 : index
    %c0_39 = arith.constant 0 : index
    %c0_40 = arith.constant 0 : index
    %61 = vector.load %arg9[%c0_38, %c0_39, %c0_40] : memref<1x32x8xf32, #tpu.memory_space<vmem>>, vector<1x32x8xf32>
    %62 = vector.shape_cast %61 : vector<1x32x8xf32> to vector<32x8xf32>
    %c0_41 = arith.constant 0 : index
    %c0_42 = arith.constant 0 : index
    %c0_43 = arith.constant 0 : index
    %63 = vector.load %arg10[%c0_41, %c0_42, %c0_43] : memref<1x32x8xf32, #tpu.memory_space<vmem>>, vector<1x32x8xf32>
    %64 = vector.shape_cast %63 : vector<1x32x8xf32> to vector<32x8xf32>
    %c0_44 = arith.constant 0 : index
    %c0_45 = arith.constant 0 : index
    %c0_46 = arith.constant 0 : index
    %65 = vector.load %arg11[%c0_44, %c0_45, %c0_46] : memref<1x32x1xf32, #tpu.memory_space<vmem>>, vector<1x32x1xf32>
    %66 = vector.shape_cast %65 : vector<1x32x1xf32> to vector<32x1xf32>
    %c0_47 = arith.constant 0 : index
    %c0_48 = arith.constant 0 : index
    %c0_49 = arith.constant 0 : index
    %67 = vector.load %arg12[%c0_47, %c0_48, %c0_49] : memref<1x32x1xf32, #tpu.memory_space<vmem>>, vector<1x32x1xf32>
    %68 = vector.shape_cast %67 : vector<1x32x1xf32> to vector<32x1xf32>
    %c0_50 = arith.constant 0 : index
    %c0_51 = arith.constant 0 : index
    %69 = vector.load %arg17[%c0_50, %c0_51] : memref<32x32xf32, #tpu.memory_space<vmem>>, vector<32x32xf32>
    %c0_52 = arith.constant 0 : index
    %c0_53 = arith.constant 0 : index
    %70 = vector.load %arg18[%c0_52, %c0_53] : memref<32x32xf32, #tpu.memory_space<vmem>>, vector<32x32xf32>
    %c0_54 = arith.constant 0 : index
    %c0_55 = arith.constant 0 : index
    %71 = vector.load %arg19[%c0_54, %c0_55] : memref<32x32xf32, #tpu.memory_space<vmem>>, vector<32x32xf32>
    %c0_56 = arith.constant 0 : index
    %c0_57 = arith.constant 0 : index
    %72 = vector.load %arg20[%c0_56, %c0_57] : memref<96x1xf32, #tpu.memory_space<vmem>>, vector<96x1xf32>
    %73 = vector.extract_strided_slice %72 {offsets = [0, 0], sizes = [32, 1], strides = [1, 1]} : vector<96x1xf32> to vector<32x1xf32>
    %74 = vector.extract_strided_slice %72 {offsets = [32, 0], sizes = [32, 1], strides = [1, 1]} : vector<96x1xf32> to vector<32x1xf32>
    %75 = vector.extract_strided_slice %72 {offsets = [64, 0], sizes = [32, 1], strides = [1, 1]} : vector<96x1xf32> to vector<32x1xf32>
    %cst_58 = arith.constant dense<0.000000e+00> : vector<32x8xf32>
    %76 = tpu.matmul %69, %62, %cst_58 {dimension_numbers = #tpu.dot_dimension_numbers<[1], [0], [0], [1], [0, 0, 1, 1], [], []>} : vector<32x32xf32>, vector<32x8xf32>, vector<32x8xf32> -> vector<32x8xf32>
    %77 = vector.broadcast %73 : vector<32x1xf32> to vector<32x8xf32>
    %78 = arith.addf %76, %77 : vector<32x8xf32>
    %cst_59 = arith.constant dense<0.000000e+00> : vector<32x8xf32>
    %79 = tpu.matmul %70, %64, %cst_59 {dimension_numbers = #tpu.dot_dimension_numbers<[1], [0], [0], [1], [0, 0, 1, 1], [], []>} : vector<32x32xf32>, vector<32x8xf32>, vector<32x8xf32> -> vector<32x8xf32>
    %80 = vector.broadcast %74 : vector<32x1xf32> to vector<32x8xf32>
    %81 = arith.addf %79, %80 : vector<32x8xf32>
    %cst_60 = arith.constant dense<0.000000e+00> : vector<32x8xf32>
    %82 = tpu.matmul %71, %60, %cst_60 {dimension_numbers = #tpu.dot_dimension_numbers<[1], [0], [0], [1], [0, 0, 1, 1], [], []>} : vector<32x32xf32>, vector<32x8xf32>, vector<32x8xf32> -> vector<32x8xf32>
    %83 = vector.broadcast %75 : vector<32x1xf32> to vector<32x8xf32>
    %84 = arith.addf %82, %83 : vector<32x8xf32>
    %cst_61 = arith.constant dense<0.000000e+00> : vector<8x8xf32>
    %85 = tpu.matmul %81, %78, %cst_61 {dimension_numbers = #tpu.dot_dimension_numbers<[0], [0], [1], [1], [0, 1, 1, 1], [], []>} : vector<32x8xf32>, vector<32x8xf32>, vector<8x8xf32> -> vector<8x8xf32>
    %cst_62 = arith.constant dense<0xFF800000> : vector<8xf32>
    %86 = vector.multi_reduction <maximumf>, %85, %cst_62 [0] : vector<8x8xf32> to vector<8xf32>
    %87 = vector.shape_cast %86 : vector<8xf32> to vector<1x8xf32>
    %88 = vector.broadcast %87 : vector<1x8xf32> to vector<8x8xf32>
    %89 = arith.subf %85, %88 : vector<8x8xf32>
    %90 = math.exp %89 : vector<8x8xf32>
    %cst_63 = arith.constant dense<0.000000e+00> : vector<8xf32>
    %91 = vector.multi_reduction <add>, %90, %cst_63 [0] : vector<8x8xf32> to vector<8xf32>
    %92 = vector.shape_cast %91 : vector<8xf32> to vector<1x8xf32>
    %93 = tpu.reciprocal %92 : vector<1x8xf32> -> vector<1x8xf32>
    %94 = vector.broadcast %93 : vector<1x8xf32> to vector<8x8xf32>
    %95 = arith.mulf %90, %94 : vector<8x8xf32>
    %96 = arith.mulf %84, %84 : vector<32x8xf32>
    %97 = tpu.concatenate %84, %96 in 0 : vector<32x8xf32>, vector<32x8xf32> -> vector<64x8xf32>
    %98 = arith.truncf %97 : vector<64x8xf32> to vector<64x8xbf16>
    %99 = arith.truncf %95 : vector<8x8xf32> to vector<8x8xbf16>
    %cst_64 = arith.constant dense<0.000000e+00> : vector<64x8xf32>
    %100 = tpu.matmul %98, %99, %cst_64 {dimension_numbers = #tpu.dot_dimension_numbers<[1], [0], [0], [1], [0, 0, 1, 1], [], []>} : vector<64x8xbf16>, vector<8x8xbf16>, vector<64x8xf32> -> vector<64x8xf32>
    %101 = vector.extract_strided_slice %100 {offsets = [0, 0], sizes = [32, 8], strides = [1, 1]} : vector<64x8xf32> to vector<32x8xf32>
    %102 = vector.extract_strided_slice %100 {offsets = [32, 0], sizes = [32, 8], strides = [1, 1]} : vector<64x8xf32> to vector<32x8xf32>
    %103 = arith.mulf %101, %101 : vector<32x8xf32>
    %104 = arith.subf %102, %103 : vector<32x8xf32>
    %cst_65 = arith.constant 0.000000e+00 : f32
    %105 = vector.broadcast %cst_65 : f32 to vector<32x8xf32>
    %106 = arith.maximumf %104, %105 : vector<32x8xf32>
    %107 = math.sqrt %106 : vector<32x8xf32>
    %108 = vector.broadcast %66 : vector<32x1xf32> to vector<32x8xf32>
    %109 = arith.subf %58, %108 : vector<32x8xf32>
    %110 = vector.broadcast %68 : vector<32x1xf32> to vector<32x8xf32>
    %111 = arith.mulf %109, %110 : vector<32x8xf32>
    %112 = arith.mulf %107, %111 : vector<32x8xf32>
    %113 = arith.addf %112, %101 : vector<32x8xf32>
    %114 = arith.truncf %113 : vector<32x8xf32> to vector<32x8xbf16>
    %c0_66 = arith.constant 0 : index
    %c0_67 = arith.constant 0 : index
    %115 = vector.load %arg21[%c0_66, %c0_67] : memref<8x16xbf16, #tpu.memory_space<vmem>>, vector<8x16xbf16>
    %cst_68 = arith.constant dense<0.000000e+00> : vector<32x16xf32>
    %116 = tpu.matmul %114, %115, %cst_68 {dimension_numbers = #tpu.dot_dimension_numbers<[1], [0], [0], [1], [0, 0, 1, 1], [], []>} : vector<32x8xbf16>, vector<8x16xbf16>, vector<32x16xf32> -> vector<32x16xf32>
    %117 = arith.addf %56, %116 : vector<32x16xf32>
    %118 = arith.truncf %117 : vector<32x16xf32> to vector<32x16xbf16>
    %119 = vector.extract_strided_slice %118 {offsets = [0, 1], sizes = [32, 1], strides = [1, 1]} : vector<32x16xbf16> to vector<32x1xbf16>
    %120 = vector.extract_strided_slice %118 {offsets = [0, 0], sizes = [32, 15], strides = [1, 1]} : vector<32x16xbf16> to vector<32x15xbf16>
    %121 = tpu.concatenate %119, %120 in 1 : vector<32x1xbf16>, vector<32x15xbf16> -> vector<32x16xbf16>
    %122 = vector.extract_strided_slice %118 {offsets = [0, 1], sizes = [32, 15], strides = [1, 1]} : vector<32x16xbf16> to vector<32x15xbf16>
    %123 = vector.extract_strided_slice %118 {offsets = [0, 14], sizes = [32, 1], strides = [1, 1]} : vector<32x16xbf16> to vector<32x1xbf16>
    %124 = tpu.concatenate %122, %123 in 1 : vector<32x15xbf16>, vector<32x1xbf16> -> vector<32x16xbf16>
    %c0_69 = arith.constant 0 : index
    %c0_70 = arith.constant 0 : index
    %c0_71 = arith.constant 0 : index
    %125 = vector.load %arg22[%c0_69, %c0_70, %c0_71] : memref<3x32x32xbf16, #tpu.memory_space<vmem>>, vector<3x32x32xbf16>
    %126 = vector.extract_strided_slice %125 {offsets = [0, 0, 0], sizes = [1, 32, 32], strides = [1, 1, 1]} : vector<3x32x32xbf16> to vector<1x32x32xbf16>
    %127 = vector.shape_cast %126 : vector<1x32x32xbf16> to vector<32x32xbf16>
    %cst_72 = arith.constant dense<0.000000e+00> : vector<32x16xf32>
    %128 = tpu.matmul %127, %121, %cst_72 {dimension_numbers = #tpu.dot_dimension_numbers<[1], [0], [0], [1], [0, 0, 1, 1], [], []>} : vector<32x32xbf16>, vector<32x16xbf16>, vector<32x16xf32> -> vector<32x16xf32>
    %129 = vector.extract_strided_slice %125 {offsets = [1, 0, 0], sizes = [1, 32, 32], strides = [1, 1, 1]} : vector<3x32x32xbf16> to vector<1x32x32xbf16>
    %130 = vector.shape_cast %129 : vector<1x32x32xbf16> to vector<32x32xbf16>
    %cst_73 = arith.constant dense<0.000000e+00> : vector<32x16xf32>
    %131 = tpu.matmul %130, %118, %cst_73 {dimension_numbers = #tpu.dot_dimension_numbers<[1], [0], [0], [1], [0, 0, 1, 1], [], []>} : vector<32x32xbf16>, vector<32x16xbf16>, vector<32x16xf32> -> vector<32x16xf32>
    %132 = arith.addf %128, %131 : vector<32x16xf32>
    %133 = vector.extract_strided_slice %125 {offsets = [2, 0, 0], sizes = [1, 32, 32], strides = [1, 1, 1]} : vector<3x32x32xbf16> to vector<1x32x32xbf16>
    %134 = vector.shape_cast %133 : vector<1x32x32xbf16> to vector<32x32xbf16>
    %cst_74 = arith.constant dense<0.000000e+00> : vector<32x16xf32>
    %135 = tpu.matmul %134, %124, %cst_74 {dimension_numbers = #tpu.dot_dimension_numbers<[1], [0], [0], [1], [0, 0, 1, 1], [], []>} : vector<32x32xbf16>, vector<32x16xbf16>, vector<32x16xf32> -> vector<32x16xf32>
    %136 = arith.addf %132, %135 : vector<32x16xf32>
    %c0_75 = arith.constant 0 : index
    %c0_76 = arith.constant 0 : index
    %137 = vector.load %arg23[%c0_75, %c0_76] : memref<32x1xf32, #tpu.memory_space<vmem>>, vector<32x1xf32>
    %138 = vector.broadcast %137 : vector<32x1xf32> to vector<32x16xf32>
    %139 = arith.addf %136, %138 : vector<32x16xf32>
    %c0_77 = arith.constant 0 : index
    %c0_78 = arith.constant 0 : index
    %c0_79 = arith.constant 0 : index
    %140 = vector.load %arg24[%c0_77, %c0_78, %c0_79] : memref<1x32x16xf32, #tpu.memory_space<vmem>>, vector<1x32x16xf32>
    %141 = vector.shape_cast %140 : vector<1x32x16xf32> to vector<32x16xf32>
    %142 = vector.shape_cast %139 : vector<32x16xf32> to vector<1x32x16xf32>
    tpu.vector_store %arg24[%c0_77, %c0_78, %c0_79], %142 {strides = array<i32>} : memref<1x32x16xf32, #tpu.memory_space<vmem>>, vector<1x32x16xf32>,
    return
  }
  func.func @transform_0(%arg0: i32) -> (i32, i32, i32) {
    %c0_i32 = arith.constant 0 : i32
    %c0_i32_0 = arith.constant 0 : i32
    %c0_i32_1 = arith.constant 0 : i32
    return %arg0, %c0_i32, %c0_i32_0 : i32, i32, i32
  }
  func.func @transform_1(%arg0: i32) -> (i32, i32, i32) {
    %c0_i32 = arith.constant 0 : i32
    %c0_i32_0 = arith.constant 0 : i32
    %c0_i32_1 = arith.constant 0 : i32
    return %arg0, %c0_i32, %c0_i32_0 : i32, i32, i32
  }
  func.func @transform_2(%arg0: i32) -> (i32, i32, i32) {
    %c0_i32 = arith.constant 0 : i32
    %c0_i32_0 = arith.constant 0 : i32
    %c0_i32_1 = arith.constant 0 : i32
    return %arg0, %c0_i32, %c0_i32_0 : i32, i32, i32
  }
  func.func @transform_3(%arg0: i32) -> (i32, i32, i32) {
    %c0_i32 = arith.constant 0 : i32
    %c0_i32_0 = arith.constant 0 : i32
    %c0_i32_1 = arith.constant 0 : i32
    return %arg0, %c0_i32, %c0_i32_0 : i32, i32, i32
  }
  func.func @transform_4(%arg0: i32) -> (i32, i32, i32) {
    %c0_i32 = arith.constant 0 : i32
    %c0_i32_0 = arith.constant 0 : i32
    %c0_i32_1 = arith.constant 0 : i32
    return %arg0, %c0_i32, %c0_i32_0 : i32, i32, i32
  }
  func.func @transform_5(%arg0: i32) -> (i32, i32, i32) {
    %c0_i32 = arith.constant 0 : i32
    %c0_i32_0 = arith.constant 0 : i32
    %c0_i32_1 = arith.constant 0 : i32
    return %arg0, %c0_i32, %c0_i32_0 : i32, i32, i32
  }
  func.func @transform_6(%arg0: i32) -> (i32, i32, i32) {
    %c0_i32 = arith.constant 0 : i32
    %c0_i32_0 = arith.constant 0 : i32
    %c0_i32_1 = arith.constant 0 : i32
    return %arg0, %c0_i32, %c0_i32_0 : i32, i32, i32
  }
  func.func @transform_7(%arg0: i32) -> (i32, i32, i32) {
    %c0_i32 = arith.constant 0 : i32
    %c0_i32_0 = arith.constant 0 : i32
    %c0_i32_1 = arith.constant 0 : i32
    return %arg0, %c0_i32, %c0_i32_0 : i32, i32, i32
  }
  func.func @transform_8(%arg0: i32) -> (i32, i32, i32) {
    %c0_i32 = arith.constant 0 : i32
    %c0_i32_0 = arith.constant 0 : i32
    %c0_i32_1 = arith.constant 0 : i32
    return %arg0, %c0_i32, %c0_i32_0 : i32, i32, i32
  }
  func.func @transform_9(%arg0: i32) -> (i32, i32, i32) {
    %c0_i32 = arith.constant 0 : i32
    %c0_i32_0 = arith.constant 0 : i32
    %c0_i32_1 = arith.constant 0 : i32
    return %arg0, %c0_i32, %c0_i32_0 : i32, i32, i32
  }
  func.func @transform_10(%arg0: i32) -> (i32, i32, i32) {
    %c0_i32 = arith.constant 0 : i32
    %c0_i32_0 = arith.constant 0 : i32
    %c0_i32_1 = arith.constant 0 : i32
    return %arg0, %c0_i32, %c0_i32_0 : i32, i32, i32
  }
  func.func @transform_11(%arg0: i32) -> (i32, i32, i32) {
    %c0_i32 = arith.constant 0 : i32
    %c0_i32_0 = arith.constant 0 : i32
    %c0_i32_1 = arith.constant 0 : i32
    return %arg0, %c0_i32, %c0_i32_0 : i32, i32, i32
  }
  func.func @transform_12(%arg0: i32) -> (i32, i32) {
    %c0_i32 = arith.constant 0 : i32
    %c0_i32_0 = arith.constant 0 : i32
    %c0_i32_1 = arith.constant 0 : i32
    return %c0_i32, %c0_i32_0 : i32, i32
  }
  func.func @transform_13(%arg0: i32) -> (i32, i32) {
    %c0_i32 = arith.constant 0 : i32
    %c0_i32_0 = arith.constant 0 : i32
    %c0_i32_1 = arith.constant 0 : i32
    return %c0_i32, %c0_i32_0 : i32, i32
  }
  func.func @transform_14(%arg0: i32) -> (i32, i32) {
    %c0_i32 = arith.constant 0 : i32
    %c0_i32_0 = arith.constant 0 : i32
    %c0_i32_1 = arith.constant 0 : i32
    return %c0_i32, %c0_i32_0 : i32, i32
  }
  func.func @transform_15(%arg0: i32) -> (i32, i32) {
    %c0_i32 = arith.constant 0 : i32
    %c0_i32_0 = arith.constant 0 : i32
    %c0_i32_1 = arith.constant 0 : i32
    return %c0_i32, %c0_i32_0 : i32, i32
  }
  func.func @transform_16(%arg0: i32) -> (i32, i32) {
    %c0_i32 = arith.constant 0 : i32
    %c0_i32_0 = arith.constant 0 : i32
    %c0_i32_1 = arith.constant 0 : i32
    return %c0_i32, %c0_i32_0 : i32, i32
  }
  func.func @transform_17(%arg0: i32) -> (i32, i32) {
    %c0_i32 = arith.constant 0 : i32
    %c0_i32_0 = arith.constant 0 : i32
    %c0_i32_1 = arith.constant 0 : i32
    return %c0_i32, %c0_i32_0 : i32, i32
  }
  func.func @transform_18(%arg0: i32) -> (i32, i32) {
    %c0_i32 = arith.constant 0 : i32
    %c0_i32_0 = arith.constant 0 : i32
    %c0_i32_1 = arith.constant 0 : i32
    return %c0_i32, %c0_i32_0 : i32, i32
  }
  func.func @transform_19(%arg0: i32) -> (i32, i32) {
    %c0_i32 = arith.constant 0 : i32
    %c0_i32_0 = arith.constant 0 : i32
    %c0_i32_1 = arith.constant 0 : i32
    return %c0_i32, %c0_i32_0 : i32, i32
  }
  func.func @transform_20(%arg0: i32) -> (i32, i32) {
    %c0_i32 = arith.constant 0 : i32
    %c0_i32_0 = arith.constant 0 : i32
    %c0_i32_1 = arith.constant 0 : i32
    return %c0_i32, %c0_i32_0 : i32, i32
  }
  func.func @transform_21(%arg0: i32) -> (i32, i32, i32) {
    %c0_i32 = arith.constant 0 : i32
    %c0_i32_0 = arith.constant 0 : i32
    %c0_i32_1 = arith.constant 0 : i32
    %c0_i32_2 = arith.constant 0 : i32
    return %c0_i32, %c0_i32_0, %c0_i32_1 : i32, i32, i32
  }
  func.func @transform_22(%arg0: i32) -> (i32, i32) {
    %c0_i32 = arith.constant 0 : i32
    %c0_i32_0 = arith.constant 0 : i32
    %c0_i32_1 = arith.constant 0 : i32
    return %c0_i32, %c0_i32_0 : i32, i32
  }
  func.func @transform_23(%arg0: i32) -> (i32, i32, i32) {
    %c0_i32 = arith.constant 0 : i32
    %c0_i32_0 = arith.constant 0 : i32
    %c0_i32_1 = arith.constant 0 : i32
    return %arg0, %c0_i32, %c0_i32_0 : i32, i32, i32
  }
}

</mosaic_0001>

<llo_original>
// kernel: transformer_forward.1
$region0: #{transformer_forward.1}
  #allocation0 [shape = 'u32[]', space=smem, size = 0x4, offset = 0x4, fixed_abs, tag = 'smem constant byte address 0x4 - core index']
  #allocation1 [shape = 'u32[72,128]{1,0:T(1,128)}', space=vmem, size = 0x9000, scoped, tag = 'internal scratch']
  %s0 = inlined_call_operand.vmem [shape: f32[2,32,16], index: 0, kind: input, shape index: {}]
  %s1 = inlined_call_operand.vmem [shape: f32[2,32,16], index: 1, kind: input, shape index: {}]
  %s2 = inlined_call_operand.vmem [shape: f32[2,32,16], index: 2, kind: input, shape index: {}]
  %s3 = inlined_call_operand.vmem [shape: f32[2,32,16], index: 3, kind: input, shape index: {}]
  %s4 = inlined_call_operand.vmem [shape: f32[2,32,1], index: 4, kind: input, shape index: {}]
  %s5 = inlined_call_operand.vmem [shape: f32[2,32,1], index: 5, kind: input, shape index: {}]
  %s6 = inlined_call_operand.vmem [shape: f32[2,32,8], index: 6, kind: input, shape index: {}]
  %s7 = inlined_call_operand.vmem [shape: f32[2,32,8], index: 7, kind: input, shape index: {}]
  %s8 = inlined_call_operand.vmem [shape: f32[2,32,8], index: 8, kind: input, shape index: {}]
  %s9 = inlined_call_operand.vmem [shape: f32[2,32,8], index: 9, kind: input, shape index: {}]
  %s10 = inlined_call_operand.vmem [shape: f32[2,32,1], index: 10, kind: input, shape index: {}]
  %s11 = inlined_call_operand.vmem [shape: f32[2,32,1], index: 11, kind: input, shape index: {}]
  %s12 = inlined_call_operand.vmem [shape: f32[32,32], index: 12, kind: input, shape index: {}]
  %s13 = inlined_call_operand.vmem [shape: f32[32,32], index: 13, kind: input, shape index: {}]
  %s14 = inlined_call_operand.vmem [shape: f32[32,32], index: 14, kind: input, shape index: {}]
  %s15 = inlined_call_operand.vmem [shape: f32[96,1], index: 15, kind: input, shape index: {}]
  %s16 = inlined_call_operand.vmem [shape: f32[32,32], index: 16, kind: input, shape index: {}]
  %s17 = inlined_call_operand.vmem [shape: f32[32,32], index: 17, kind: input, shape index: {}]
  %s18 = inlined_call_operand.vmem [shape: f32[32,32], index: 18, kind: input, shape index: {}]
  %s19 = inlined_call_operand.vmem [shape: f32[96,1], index: 19, kind: input, shape index: {}]
  %s20 = inlined_call_operand.vmem [shape: bf16[8,16], index: 20, kind: input, shape index: {}]
  %s21 = inlined_call_operand.vmem [shape: bf16[3,32,32], index: 21, kind: input, shape index: {}]
  %s22 = inlined_call_operand.vmem [shape: f32[32,1], index: 22, kind: input, shape index: {}]
  %s23 = inlined_call_operand.vmem [shape: f32[2,32,16], index: 23, kind: output, shape index: {}]
  %s24 = sld [smem:[#allocation0]]
  $region125: #{transformer_forward.1} parent=0
    _
  %s26 = ssub.s32 1, %s24
  %s27 = scalar_select 0, %s26, %s24
  loop: start=0, step=1, limit=4
  $region2: #{transformer_forward.1} parent=0 // loop_pre_header
    _
  $region3: #{transformer_forward.1} parent=0 // loop_header
    %s29 = sphi 0, %s33
    %p30 = scmp.ge.s32.totalorder %s29, 4
    %s39 = sphi 0, %s41
    %s42 = sphi 0, %s39
    %s43 = sphi 0, %s42
    %s59 = sphi 0, %s43
    %s65 = sphi 0, %s67
    %s68 = sphi 0, %s65
    %s69 = sphi 0, %s68
    %s85 = sphi 0, %s69
    %s91 = sphi 0, %s93
    %s94 = sphi 0, %s91
    %s95 = sphi 0, %s94
    %s111 = sphi 0, %s95
    %s117 = sphi 0, %s119
    %s120 = sphi 0, %s117
    %s121 = sphi 0, %s120
    %s137 = sphi 0, %s121
    %s143 = sphi 0, %s145
    %s146 = sphi 0, %s143
    %s147 = sphi 0, %s146
    %s163 = sphi 0, %s147
    %s169 = sphi 0, %s171
    %s172 = sphi 0, %s169
    %s173 = sphi 0, %s172
    %s189 = sphi 0, %s173
    %s195 = sphi 0, %s197
    %s198 = sphi 0, %s195
    %s199 = sphi 0, %s198
    %s215 = sphi 0, %s199
    %s221 = sphi 0, %s223
    %s224 = sphi 0, %s221
    %s225 = sphi 0, %s224
    %s241 = sphi 0, %s225
    %s247 = sphi 0, %s249
    %s250 = sphi 0, %s247
    %s251 = sphi 0, %s250
    %s267 = sphi 0, %s251
    %s273 = sphi 0, %s275
    %s276 = sphi 0, %s273
    %s277 = sphi 0, %s276
    %s293 = sphi 0, %s277
    %s299 = sphi 0, %s301
    %s302 = sphi 0, %s299
    %s303 = sphi 0, %s302
    %s319 = sphi 0, %s303
    %s325 = sphi 0, %s327
    %s328 = sphi 0, %s325
    %s329 = sphi 0, %s328
    %s345 = sphi 0, %s329
    %s349 = sphi 0, %s349
    %s351 = sphi 0, %s349
    %s352 = sphi 0, %s351
    %s366 = sphi 0, %s352
    %s370 = sphi 0, %s370
    %s372 = sphi 0, %s370
    %s373 = sphi 0, %s372
    %s387 = sphi 0, %s373
    %s391 = sphi 0, %s391
    %s393 = sphi 0, %s391
    %s394 = sphi 0, %s393
    %s408 = sphi 0, %s394
    %s412 = sphi 0, %s412
    %s414 = sphi 0, %s412
    %s415 = sphi 0, %s414
    %s429 = sphi 0, %s415
    %s433 = sphi 0, %s433
    %s435 = sphi 0, %s433
    %s436 = sphi 0, %s435
    %s450 = sphi 0, %s436
    %s454 = sphi 0, %s454
    %s456 = sphi 0, %s454
    %s457 = sphi 0, %s456
    %s471 = sphi 0, %s457
    %s475 = sphi 0, %s475
    %s477 = sphi 0, %s475
    %s478 = sphi 0, %s477
    %s492 = sphi 0, %s478
    %s496 = sphi 0, %s496
    %s498 = sphi 0, %s496
    %s499 = sphi 0, %s498
    %s513 = sphi 0, %s499
    %s517 = sphi 0, %s517
    %s519 = sphi 0, %s517
    %s520 = sphi 0, %s519
    %s534 = sphi 0, %s520
    %s538 = sphi 0, %s538
    %s540 = sphi 0, %s538
    %s541 = sphi 0, %s540
    %s555 = sphi 0, %s541
    %s559 = sphi 0, %s559
    %s561 = sphi 0, %s559
    %s562 = sphi 0, %s561
    %s576 = sphi 0, %s562
    %s582 = sphi 0, %s584
    %s585 = sphi 0, %s582
    %s586 = sphi 0, %s585
    %s602 = sphi 0, %s586
  $region4: #{transformer_forward.1} parent=0 // loop_header_branch
    %32 = sbr.rel (%p30) target = $region8
  $region5: #{transformer_forward.1} parent=0 // loop_body
    %s34 = ssub.s32 %s29, 1
    %s35 = ssub.s32 %s29, 2
    %s36 = sadd.s32 %s29, 1
    %s37 = ssub.s32 %s29, %s36
    %p38 = scmp.eq.s32.totalorder %s37, 0
    %s40 = sadd.s32 %s39, 1
    %s41 = scalar_select %p38, %s39, %s40
    %p44 = pneg %p38
    %p45 = scmp.eq.s32.totalorder %s29, 1
    %p46 = por %p44, %p45
    %p47 = scmp.ne.s32.totalorder %s39, %s42
    %p48 = scmp.eq.s32.totalorder %s29, 0
    %p49 = por %p47, %p48
    %p50 = scmp.ne.s32.totalorder %s39, %s42
    %p51 = scmp.eq.s32.totalorder %s34, 1
    %p52 = por %p50, %p51
    %p53 = scmp.ne.s32.totalorder %s42, %s43
    %p54 = scmp.eq.s32.totalorder %s34, 0
    %p55 = por %p53, %p54
    %p56 = scmp.ne.s32.totalorder %s42, %s43
    %p57 = scmp.eq.s32.totalorder %s35, 1
    %p58 = por %p56, %p57
    %p60 = scmp.ne.s32.totalorder %s43, %s59
    %p61 = scmp.eq.s32.totalorder %s35, 0
    %p62 = por %p60, %p61
    %s63 = ssub.s32 %s29, %s36
    %p64 = scmp.eq.s32.totalorder %s63, 0
    %s66 = sadd.s32 %s65, 1
    %s67 = scalar_select %p64, %s65, %s66
    %p70 = pneg %p64
    %p71 = scmp.eq.s32.totalorder %s29, 1
    %p72 = por %p70, %p71
    %p73 = scmp.ne.s32.totalorder %s65, %s68
    %p74 = scmp.eq.s32.totalorder %s29, 0
    %p75 = por %p73, %p74
    %p76 = scmp.ne.s32.totalorder %s65, %s68
    %p77 = scmp.eq.s32.totalorder %s34, 1
    %p78 = por %p76, %p77
    %p79 = scmp.ne.s32.totalorder %s68, %s69
    %p80 = scmp.eq.s32.totalorder %s34, 0
    %p81 = por %p79, %p80
    %p82 = scmp.ne.s32.totalorder %s68, %s69
    %p83 = scmp.eq.s32.totalorder %s35, 1
    %p84 = por %p82, %p83
    %p86 = scmp.ne.s32.totalorder %s69, %s85
    %p87 = scmp.eq.s32.totalorder %s35, 0
    %p88 = por %p86, %p87
    %s89 = ssub.s32 %s29, %s36
    %p90 = scmp.eq.s32.totalorder %s89, 0
    %s92 = sadd.s32 %s91, 1
    %s93 = scalar_select %p90, %s91, %s92
    %p96 = pneg %p90
    %p97 = scmp.eq.s32.totalorder %s29, 1
    %p98 = por %p96, %p97
    %p99 = scmp.ne.s32.totalorder %s91, %s94
    %p100 = scmp.eq.s32.totalorder %s29, 0
    %p101 = por %p99, %p100
    %p102 = scmp.ne.s32.totalorder %s91, %s94
    %p103 = scmp.eq.s32.totalorder %s34, 1
    %p104 = por %p102, %p103
    %p105 = scmp.ne.s32.totalorder %s94, %s95
    %p106 = scmp.eq.s32.totalorder %s34, 0
    %p107 = por %p105, %p106
    %p108 = scmp.ne.s32.totalorder %s94, %s95
    %p109 = scmp.eq.s32.totalorder %s35, 1
    %p110 = por %p108, %p109
    %p112 = scmp.ne.s32.totalorder %s95, %s111
    %p113 = scmp.eq.s32.totalorder %s35, 0
    %p114 = por %p112, %p113
    %s115 = ssub.s32 %s29, %s36
    %p116 = scmp.eq.s32.totalorder %s115, 0
    %s118 = sadd.s32 %s117, 1
    %s119 = scalar_select %p116, %s117, %s118
    %p122 = pneg %p116
    %p123 = scmp.eq.s32.totalorder %s29, 1
    %p124 = por %p122, %p123
    %p125 = scmp.ne.s32.totalorder %s117, %s120
    %p126 = scmp.eq.s32.totalorder %s29, 0
    %p127 = por %p125, %p126
    %p128 = scmp.ne.s32.totalorder %s117, %s120
    %p129 = scmp.eq.s32.totalorder %s34, 1
    %p130 = por %p128, %p129
    %p131 = scmp.ne.s32.totalorder %s120, %s121
    %p132 = scmp.eq.s32.totalorder %s34, 0
    %p133 = por %p131, %p132
    %p134 = scmp.ne.s32.totalorder %s120, %s121
    %p135 = scmp.eq.s32.totalorder %s35, 1
    %p136 = por %p134, %p135
    %p138 = scmp.ne.s32.totalorder %s121, %s137
    %p139 = scmp.eq.s32.totalorder %s35, 0
    %p140 = por %p138, %p139
    %s141 = ssub.s32 %s29, %s36
    %p142 = scmp.eq.s32.totalorder %s141, 0
    %s144 = sadd.s32 %s143, 1
    %s145 = scalar_select %p142, %s143, %s144
    %p148 = pneg %p142
    %p149 = scmp.eq.s32.totalorder %s29, 1
    %p150 = por %p148, %p149
    %p151 = scmp.ne.s32.totalorder %s143, %s146
    %p152 = scmp.eq.s32.totalorder %s29, 0
    %p153 = por %p151, %p152
    %p154 = scmp.ne.s32.totalorder %s143, %s146
    %p155 = scmp.eq.s32.totalorder %s34, 1
    %p156 = por %p154, %p155
    %p157 = scmp.ne.s32.totalorder %s146, %s147
    %p158 = scmp.eq.s32.totalorder %s34, 0
    %p159 = por %p157, %p158
    %p160 = scmp.ne.s32.totalorder %s146, %s147
    %p161 = scmp.eq.s32.totalorder %s35, 1
    %p162 = por %p160, %p161
    %p164 = scmp.ne.s32.totalorder %s147, %s163
    %p165 = scmp.eq.s32.totalorder %s35, 0
    %p166 = por %p164, %p165
    %s167 = ssub.s32 %s29, %s36
    %p168 = scmp.eq.s32.totalorder %s167, 0
    %s170 = sadd.s32 %s169, 1
    %s171 = scalar_select %p168, %s169, %s170
    %p174 = pneg %p168
    %p175 = scmp.eq.s32.totalorder %s29, 1
    %p176 = por %p174, %p175
    %p177 = scmp.ne.s32.totalorder %s169, %s172
    %p178 = scmp.eq.s32.totalorder %s29, 0
    %p179 = por %p177, %p178
    %p180 = scmp.ne.s32.totalorder %s169, %s172
    %p181 = scmp.eq.s32.totalorder %s34, 1
    %p182 = por %p180, %p181
    %p183 = scmp.ne.s32.totalorder %s172, %s173
    %p184 = scmp.eq.s32.totalorder %s34, 0
    %p185 = por %p183, %p184
    %p186 = scmp.ne.s32.totalorder %s172, %s173
    %p187 = scmp.eq.s32.totalorder %s35, 1
    %p188 = por %p186, %p187
    %p190 = scmp.ne.s32.totalorder %s173, %s189
    %p191 = scmp.eq.s32.totalorder %s35, 0
    %p192 = por %p190, %p191
    %s193 = ssub.s32 %s29, %s36
    %p194 = scmp.eq.s32.totalorder %s193, 0
    %s196 = sadd.s32 %s195, 1
    %s197 = scalar_select %p194, %s195, %s196
    %p200 = pneg %p194
    %p201 = scmp.eq.s32.totalorder %s29, 1
    %p202 = por %p200, %p201
    %p203 = scmp.ne.s32.totalorder %s195, %s198
    %p204 = scmp.eq.s32.totalorder %s29, 0
    %p205 = por %p203, %p204
    %p206 = scmp.ne.s32.totalorder %s195, %s198
    %p207 = scmp.eq.s32.totalorder %s34, 1
    %p208 = por %p206, %p207
    %p209 = scmp.ne.s32.totalorder %s198, %s199
    %p210 = scmp.eq.s32.totalorder %s34, 0
    %p211 = por %p209, %p210
    %p212 = scmp.ne.s32.totalorder %s198, %s199
    %p213 = scmp.eq.s32.totalorder %s35, 1
    %p214 = por %p212, %p213
    %p216 = scmp.ne.s32.totalorder %s199, %s215
    %p217 = scmp.eq.s32.totalorder %s35, 0
    %p218 = por %p216, %p217
    %s219 = ssub.s32 %s29, %s36
    %p220 = scmp.eq.s32.totalorder %s219, 0
    %s222 = sadd.s32 %s221, 1
    %s223 = scalar_select %p220, %s221, %s222
    %p226 = pneg %p220
    %p227 = scmp.eq.s32.totalorder %s29, 1
    %p228 = por %p226, %p227
    %p229 = scmp.ne.s32.totalorder %s221, %s224
    %p230 = scmp.eq.s32.totalorder %s29, 0
    %p231 = por %p229, %p230
    %p232 = scmp.ne.s32.totalorder %s221, %s224
    %p233 = scmp.eq.s32.totalorder %s34, 1
    %p234 = por %p232, %p233
    %p235 = scmp.ne.s32.totalorder %s224, %s225
    %p236 = scmp.eq.s32.totalorder %s34, 0
    %p237 = por %p235, %p236
    %p238 = scmp.ne.s32.totalorder %s224, %s225
    %p239 = scmp.eq.s32.totalorder %s35, 1
    %p240 = por %p238, %p239
    %p242 = scmp.ne.s32.totalorder %s225, %s241
    %p243 = scmp.eq.s32.totalorder %s35, 0
    %p244 = por %p242, %p243
    %s245 = ssub.s32 %s29, %s36
    %p246 = scmp.eq.s32.totalorder %s245, 0
    %s248 = sadd.s32 %s247, 1
    %s249 = scalar_select %p246, %s247, %s248
    %p252 = pneg %p246
    %p253 = scmp.eq.s32.totalorder %s29, 1
    %p254 = por %p252, %p253
    %p255 = scmp.ne.s32.totalorder %s247, %s250
    %p256 = scmp.eq.s32.totalorder %s29, 0
    %p257 = por %p255, %p256
    %p258 = scmp.ne.s32.totalorder %s247, %s250
    %p259 = scmp.eq.s32.totalorder %s34, 1
    %p260 = por %p258, %p259
    %p261 = scmp.ne.s32.totalorder %s250, %s251
    %p262 = scmp.eq.s32.totalorder %s34, 0
    %p263 = por %p261, %p262
    %p264 = scmp.ne.s32.totalorder %s250, %s251
    %p265 = scmp.eq.s32.totalorder %s35, 1
    %p266 = por %p264, %p265
    %p268 = scmp.ne.s32.totalorder %s251, %s267
    %p269 = scmp.eq.s32.totalorder %s35, 0
    %p270 = por %p268, %p269
    %s271 = ssub.s32 %s29, %s36
    %p272 = scmp.eq.s32.totalorder %s271, 0
    %s274 = sadd.s32 %s273, 1
    %s275 = scalar_select %p272, %s273, %s274
    %p278 = pneg %p272
    %p279 = scmp.eq.s32.totalorder %s29, 1
    %p280 = por %p278, %p279
    %p281 = scmp.ne.s32.totalorder %s273, %s276
    %p282 = scmp.eq.s32.totalorder %s29, 0
    %p283 = por %p281, %p282
    %p284 = scmp.ne.s32.totalorder %s273, %s276
    %p285 = scmp.eq.s32.totalorder %s34, 1
    %p286 = por %p284, %p285
    %p287 = scmp.ne.s32.totalorder %s276, %s277
    %p288 = scmp.eq.s32.totalorder %s34, 0
    %p289 = por %p287, %p288
    %p290 = scmp.ne.s32.totalorder %s276, %s277
    %p291 = scmp.eq.s32.totalorder %s35, 1
    %p292 = por %p290, %p291
    %p294 = scmp.ne.s32.totalorder %s277, %s293
    %p295 = scmp.eq.s32.totalorder %s35, 0
    %p296 = por %p294, %p295
    %s297 = ssub.s32 %s29, %s36
    %p298 = scmp.eq.s32.totalorder %s297, 0
    %s300 = sadd.s32 %s299, 1
    %s301 = scalar_select %p298, %s299, %s300
    %p304 = pneg %p298
    %p305 = scmp.eq.s32.totalorder %s29, 1
    %p306 = por %p304, %p305
    %p307 = scmp.ne.s32.totalorder %s299, %s302
    %p308 = scmp.eq.s32.totalorder %s29, 0
    %p309 = por %p307, %p308
    %p310 = scmp.ne.s32.totalorder %s299, %s302
    %p311 = scmp.eq.s32.totalorder %s34, 1
    %p312 = por %p310, %p311
    %p313 = scmp.ne.s32.totalorder %s302, %s303
    %p314 = scmp.eq.s32.totalorder %s34, 0
    %p315 = por %p313, %p314
    %p316 = scmp.ne.s32.totalorder %s302, %s303
    %p317 = scmp.eq.s32.totalorder %s35, 1
    %p318 = por %p316, %p317
    %p320 = scmp.ne.s32.totalorder %s303, %s319
    %p321 = scmp.eq.s32.totalorder %s35, 0
    %p322 = por %p320, %p321
    %s323 = ssub.s32 %s29, %s36
    %p324 = scmp.eq.s32.totalorder %s323, 0
    %s326 = sadd.s32 %s325, 1
    %s327 = scalar_select %p324, %s325, %s326
    %p330 = pneg %p324
    %p331 = scmp.eq.s32.totalorder %s29, 1
    %p332 = por %p330, %p331
    %p333 = scmp.ne.s32.totalorder %s325, %s328
    %p334 = scmp.eq.s32.totalorder %s29, 0
    %p335 = por %p333, %p334
    %p336 = scmp.ne.s32.totalorder %s325, %s328
    %p337 = scmp.eq.s32.totalorder %s34, 1
    %p338 = por %p336, %p337
    %p339 = scmp.ne.s32.totalorder %s328, %s329
    %p340 = scmp.eq.s32.totalorder %s34, 0
    %p341 = por %p339, %p340
    %p342 = scmp.ne.s32.totalorder %s328, %s329
    %p343 = scmp.eq.s32.totalorder %s35, 1
    %p344 = por %p342, %p343
    %p346 = scmp.ne.s32.totalorder %s329, %s345
    %p347 = scmp.eq.s32.totalorder %s35, 0
    %p348 = por %p346, %p347
    %s350 = sadd.s32 %s349, 1
    %p353 = scmp.eq.s32.totalorder %s29, 1
    %p354 = scmp.ne.s32.totalorder %s349, %s351
    %p355 = scmp.eq.s32.totalorder %s29, 0
    %p356 = por %p354, %p355
    %p357 = scmp.ne.s32.totalorder %s349, %s351
    %p358 = scmp.eq.s32.totalorder %s34, 1
    %p359 = por %p357, %p358
    %p360 = scmp.ne.s32.totalorder %s351, %s352
    %p361 = scmp.eq.s32.totalorder %s34, 0
    %p362 = por %p360, %p361
    %p363 = scmp.ne.s32.totalorder %s351, %s352
    %p364 = scmp.eq.s32.totalorder %s35, 1
    %p365 = por %p363, %p364
    %p367 = scmp.ne.s32.totalorder %s352, %s366
    %p368 = scmp.eq.s32.totalorder %s35, 0
    %p369 = por %p367, %p368
    %s371 = sadd.s32 %s370, 1
    %p374 = scmp.eq.s32.totalorder %s29, 1
    %p375 = scmp.ne.s32.totalorder %s370, %s372
    %p376 = scmp.eq.s32.totalorder %s29, 0
    %p377 = por %p375, %p376
    %p378 = scmp.ne.s32.totalorder %s370, %s372
    %p379 = scmp.eq.s32.totalorder %s34, 1
    %p380 = por %p378, %p379
    %p381 = scmp.ne.s32.totalorder %s372, %s373
    %p382 = scmp.eq.s32.totalorder %s34, 0
    %p383 = por %p381, %p382
    %p384 = scmp.ne.s32.totalorder %s372, %s373
    %p385 = scmp.eq.s32.totalorder %s35, 1
    %p386 = por %p384, %p385
    %p388 = scmp.ne.s32.totalorder %s373, %s387
    %p389 = scmp.eq.s32.totalorder %s35, 0
    %p390 = por %p388, %p389
    %s392 = sadd.s32 %s391, 1
    %p395 = scmp.eq.s32.totalorder %s29, 1
    %p396 = scmp.ne.s32.totalorder %s391, %s393
    %p397 = scmp.eq.s32.totalorder %s29, 0
    %p398 = por %p396, %p397
    %p399 = scmp.ne.s32.totalorder %s391, %s393
    %p400 = scmp.eq.s32.totalorder %s34, 1
    %p401 = por %p399, %p400
    %p402 = scmp.ne.s32.totalorder %s393, %s394
    %p403 = scmp.eq.s32.totalorder %s34, 0
    %p404 = por %p402, %p403
    %p405 = scmp.ne.s32.totalorder %s393, %s394
    %p406 = scmp.eq.s32.totalorder %s35, 1
    %p407 = por %p405, %p406
    %p409 = scmp.ne.s32.totalorder %s394, %s408
    %p410 = scmp.eq.s32.totalorder %s35, 0
    %p411 = por %p409, %p410
    %s413 = sadd.s32 %s412, 1
    %p416 = scmp.eq.s32.totalorder %s29, 1
    %p417 = scmp.ne.s32.totalorder %s412, %s414
    %p418 = scmp.eq.s32.totalorder %s29, 0
    %p419 = por %p417, %p418
    %p420 = scmp.ne.s32.totalorder %s412, %s414
    %p421 = scmp.eq.s32.totalorder %s34, 1
    %p422 = por %p420, %p421
    %p423 = scmp.ne.s32.totalorder %s414, %s415
    %p424 = scmp.eq.s32.totalorder %s34, 0
    %p425 = por %p423, %p424
    %p426 = scmp.ne.s32.totalorder %s414, %s415
    %p427 = scmp.eq.s32.totalorder %s35, 1
    %p428 = por %p426, %p427
    %p430 = scmp.ne.s32.totalorder %s415, %s429
    %p431 = scmp.eq.s32.totalorder %s35, 0
    %p432 = por %p430, %p431
    %s434 = sadd.s32 %s433, 1
    %p437 = scmp.eq.s32.totalorder %s29, 1
    %p438 = scmp.ne.s32.totalorder %s433, %s435
    %p439 = scmp.eq.s32.totalorder %s29, 0
    %p440 = por %p438, %p439
    %p441 = scmp.ne.s32.totalorder %s433, %s435
    %p442 = scmp.eq.s32.totalorder %s34, 1
    %p443 = por %p441, %p442
    %p444 = scmp.ne.s32.totalorder %s435, %s436
    %p445 = scmp.eq.s32.totalorder %s34, 0
    %p446 = por %p444, %p445
    %p447 = scmp.ne.s32.totalorder %s435, %s436
    %p448 = scmp.eq.s32.totalorder %s35, 1
    %p449 = por %p447, %p448
    %p451 = scmp.ne.s32.totalorder %s436, %s450
    %p452 = scmp.eq.s32.totalorder %s35, 0
    %p453 = por %p451, %p452
    %s455 = sadd.s32 %s454, 1
    %p458 = scmp.eq.s32.totalorder %s29, 1
    %p459 = scmp.ne.s32.totalorder %s454, %s456
    %p460 = scmp.eq.s32.totalorder %s29, 0
    %p461 = por %p459, %p460
    %p462 = scmp.ne.s32.totalorder %s454, %s456
    %p463 = scmp.eq.s32.totalorder %s34, 1
    %p464 = por %p462, %p463
    %p465 = scmp.ne.s32.totalorder %s456, %s457
    %p466 = scmp.eq.s32.totalorder %s34, 0
    %p467 = por %p465, %p466
    %p468 = scmp.ne.s32.totalorder %s456, %s457
    %p469 = scmp.eq.s32.totalorder %s35, 1
    %p470 = por %p468, %p469
    %p472 = scmp.ne.s32.totalorder %s457, %s471
    %p473 = scmp.eq.s32.totalorder %s35, 0
    %p474 = por %p472, %p473
    %s476 = sadd.s32 %s475, 1
    %p479 = scmp.eq.s32.totalorder %s29, 1
    %p480 = scmp.ne.s32.totalorder %s475, %s477
    %p481 = scmp.eq.s32.totalorder %s29, 0
    %p482 = por %p480, %p481
    %p483 = scmp.ne.s32.totalorder %s475, %s477
    %p484 = scmp.eq.s32.totalorder %s34, 1
    %p485 = por %p483, %p484
    %p486 = scmp.ne.s32.totalorder %s477, %s478
    %p487 = scmp.eq.s32.totalorder %s34, 0
    %p488 = por %p486, %p487
    %p489 = scmp.ne.s32.totalorder %s477, %s478
    %p490 = scmp.eq.s32.totalorder %s35, 1
    %p491 = por %p489, %p490
    %p493 = scmp.ne.s32.totalorder %s478, %s492
    %p494 = scmp.eq.s32.totalorder %s35, 0
    %p495 = por %p493, %p494
    %s497 = sadd.s32 %s496, 1
    %p500 = scmp.eq.s32.totalorder %s29, 1
    %p501 = scmp.ne.s32.totalorder %s496, %s498
    %p502 = scmp.eq.s32.totalorder %s29, 0
    %p503 = por %p501, %p502
    %p504 = scmp.ne.s32.totalorder %s496, %s498
    %p505 = scmp.eq.s32.totalorder %s34, 1
    %p506 = por %p504, %p505
    %p507 = scmp.ne.s32.totalorder %s498, %s499
    %p508 = scmp.eq.s32.totalorder %s34, 0
    %p509 = por %p507, %p508
    %p510 = scmp.ne.s32.totalorder %s498, %s499
    %p511 = scmp.eq.s32.totalorder %s35, 1
    %p512 = por %p510, %p511
    %p514 = scmp.ne.s32.totalorder %s499, %s513
    %p515 = scmp.eq.s32.totalorder %s35, 0
    %p516 = por %p514, %p515
    %s518 = sadd.s32 %s517, 1
    %p521 = scmp.eq.s32.totalorder %s29, 1
    %p522 = scmp.ne.s32.totalorder %s517, %s519
    %p523 = scmp.eq.s32.totalorder %s29, 0
    %p524 = por %p522, %p523
    %p525 = scmp.ne.s32.totalorder %s517, %s519
    %p526 = scmp.eq.s32.totalorder %s34, 1
    %p527 = por %p525, %p526
    %p528 = scmp.ne.s32.totalorder %s519, %s520
    %p529 = scmp.eq.s32.totalorder %s34, 0
    %p530 = por %p528, %p529
    %p531 = scmp.ne.s32.totalorder %s519, %s520
    %p532 = scmp.eq.s32.totalorder %s35, 1
    %p533 = por %p531, %p532
    %p535 = scmp.ne.s32.totalorder %s520, %s534
    %p536 = scmp.eq.s32.totalorder %s35, 0
    %p537 = por %p535, %p536
    %s539 = sadd.s32 %s538, 1
    %p542 = scmp.eq.s32.totalorder %s29, 1
    %p543 = scmp.ne.s32.totalorder %s538, %s540
    %p544 = scmp.eq.s32.totalorder %s29, 0
    %p545 = por %p543, %p544
    %p546 = scmp.ne.s32.totalorder %s538, %s540
    %p547 = scmp.eq.s32.totalorder %s34, 1
    %p548 = por %p546, %p547
    %p549 = scmp.ne.s32.totalorder %s540, %s541
    %p550 = scmp.eq.s32.totalorder %s34, 0
    %p551 = por %p549, %p550
    %p552 = scmp.ne.s32.totalorder %s540, %s541
    %p553 = scmp.eq.s32.totalorder %s35, 1
    %p554 = por %p552, %p553
    %p556 = scmp.ne.s32.totalorder %s541, %s555
    %p557 = scmp.eq.s32.totalorder %s35, 0
    %p558 = por %p556, %p557
    %s560 = sadd.s32 %s559, 1
    %p563 = scmp.eq.s32.totalorder %s29, 1
    %p564 = scmp.ne.s32.totalorder %s559, %s561
    %p565 = scmp.eq.s32.totalorder %s29, 0
    %p566 = por %p564, %p565
    %p567 = scmp.ne.s32.totalorder %s559, %s561
    %p568 = scmp.eq.s32.totalorder %s34, 1
    %p569 = por %p567, %p568
    %p570 = scmp.ne.s32.totalorder %s561, %s562
    %p571 = scmp.eq.s32.totalorder %s34, 0
    %p572 = por %p570, %p571
    %p573 = scmp.ne.s32.totalorder %s561, %s562
    %p574 = scmp.eq.s32.totalorder %s35, 1
    %p575 = por %p573, %p574
    %p577 = scmp.ne.s32.totalorder %s562, %s576
    %p578 = scmp.eq.s32.totalorder %s35, 0
    %p579 = por %p577, %p578
    %s580 = ssub.s32 %s29, %s36
    %p581 = scmp.eq.s32.totalorder %s580, 0
    %s583 = sadd.s32 %s582, 1
    %s584 = scalar_select %p581, %s582, %s583
    %p587 = pneg %p581
    %p588 = scmp.eq.s32.totalorder %s29, 1
    %p589 = por %p587, %p588
    %p590 = scmp.ne.s32.totalorder %s582, %s585
    %p591 = scmp.eq.s32.totalorder %s29, 0
    %p592 = por %p590, %p591
    %p593 = scmp.ne.s32.totalorder %s582, %s585
    %p594 = scmp.eq.s32.totalorder %s34, 1
    %p595 = por %p593, %p594
    %p596 = scmp.ne.s32.totalorder %s585, %s586
    %p597 = scmp.eq.s32.totalorder %s34, 0
    %p598 = por %p596, %p597
    %p599 = scmp.ne.s32.totalorder %s585, %s586
    %p600 = scmp.eq.s32.totalorder %s35, 1
    %p601 = por %p599, %p600
    %p603 = scmp.ne.s32.totalorder %s586, %s602
    %p604 = scmp.eq.s32.totalorder %s35, 0
    %p605 = por %p603, %p604
    %p606 = scmp.le.s32.totalorder 1, %s29
    %p607 = scmp.lt.s32.totalorder %s29, 3
    %p608 = pnand %p606, %p607
    %p609 = pneg %p608
    // Predicated region
    $region9: #{transformer_forward.1} parent=5 // pred_check
      _
    $region10: #{transformer_forward.1} parent=5 // pred_check_branch
      %611 = sbr.rel (%p608) target = $region12
    $region11: #{transformer_forward.1} parent=5 // pred_region
      %s612 = ssub.s32 %s29, 1
      // Predicated region
      $region13: #{transformer_forward.1} parent=11 // pred_check
        %p613 = pneg %p362
      $region14: #{transformer_forward.1} parent=11 // pred_check_branch
        %615 = sbr.rel (%p613) target = $region16
      $region15: #{transformer_forward.1} parent=11 // pred_region
        _
      $region16: #{transformer_forward.1} parent=11 // pred_fallthru
        _
      // Predicated region
      $region17: #{transformer_forward.1} parent=11 // pred_check
        %p616 = pneg %p383
      $region18: #{transformer_forward.1} parent=11 // pred_check_branch
        %618 = sbr.rel (%p616) target = $region20
      $region19: #{transformer_forward.1} parent=11 // pred_region
        _
      $region20: #{transformer_forward.1} parent=11 // pred_fallthru
        _
      // Predicated region
      $region21: #{transformer_forward.1} parent=11 // pred_check
        %p619 = pneg %p404
      $region22: #{transformer_forward.1} parent=11 // pred_check_branch
        %621 = sbr.rel (%p619) target = $region24
      $region23: #{transformer_forward.1} parent=11 // pred_region
        _
      $region24: #{transformer_forward.1} parent=11 // pred_fallthru
        _
      // Predicated region
      $region25: #{transformer_forward.1} parent=11 // pred_check
        %p622 = pneg %p425
      $region26: #{transformer_forward.1} parent=11 // pred_check_branch
        %624 = sbr.rel (%p622) target = $region28
      $region27: #{transformer_forward.1} parent=11 // pred_region
        _
      $region28: #{transformer_forward.1} parent=11 // pred_fallthru
        _
      // Predicated region
      $region29: #{transformer_forward.1} parent=11 // pred_check
        %p625 = pneg %p446
      $region30: #{transformer_forward.1} parent=11 // pred_check_branch
        %627 = sbr.rel (%p625) target = $region32
      $region31: #{transformer_forward.1} parent=11 // pred_region
        _
      $region32: #{transformer_forward.1} parent=11 // pred_fallthru
        _
      // Predicated region
      $region33: #{transformer_forward.1} parent=11 // pred_check
        %p628 = pneg %p467
      $region34: #{transformer_forward.1} parent=11 // pred_check_branch
        %630 = sbr.rel (%p628) target = $region36
      $region35: #{transformer_forward.1} parent=11 // pred_region
        _
      $region36: #{transformer_forward.1} parent=11 // pred_fallthru
        _
      // Predicated region
      $region37: #{transformer_forward.1} parent=11 // pred_check
        %p631 = pneg %p488
      $region38: #{transformer_forward.1} parent=11 // pred_check_branch
        %633 = sbr.rel (%p631) target = $region40
      $region39: #{transformer_forward.1} parent=11 // pred_region
        _
      $region40: #{transformer_forward.1} parent=11 // pred_fallthru
        _
      // Predicated region
      $region41: #{transformer_forward.1} parent=11 // pred_check
        %p634 = pneg %p509
      $region42: #{transformer_forward.1} parent=11 // pred_check_branch
        %636 = sbr.rel (%p634) target = $region44
      $region43: #{transformer_forward.1} parent=11 // pred_region
        _
      $region44: #{transformer_forward.1} parent=11 // pred_fallthru
        _
      // Predicated region
      $region45: #{transformer_forward.1} parent=11 // pred_check
        %p637 = pneg %p530
      $region46: #{transformer_forward.1} parent=11 // pred_check_branch
        %639 = sbr.rel (%p637) target = $region48
      $region47: #{transformer_forward.1} parent=11 // pred_region
        _
      $region48: #{transformer_forward.1} parent=11 // pred_fallthru
        _
      // Predicated region
      $region49: #{transformer_forward.1} parent=11 // pred_check
        %p640 = pneg %p551
      $region50: #{transformer_forward.1} parent=11 // pred_check_branch
        %642 = sbr.rel (%p640) target = $region52
      $region51: #{transformer_forward.1} parent=11 // pred_region
        _
      $region52: #{transformer_forward.1} parent=11 // pred_fallthru
        _
      // Predicated region
      $region53: #{transformer_forward.1} parent=11 // pred_check
        %p643 = pneg %p572
      $region54: #{transformer_forward.1} parent=11 // pred_check_branch
        %645 = sbr.rel (%p643) target = $region56
      $region55: #{transformer_forward.1} parent=11 // pred_region
        _
      $region56: #{transformer_forward.1} parent=11 // pred_fallthru
        _
    $region12: #{transformer_forward.1} parent=5 // pred_fallthru
      _
    %p646 = scmp.lt.s32.totalorder %s29, 2
    // Predicated region
    $region57: #{transformer_forward.1} parent=5 // pred_check
      %p647 = pneg %p646
    $region58: #{transformer_forward.1} parent=5 // pred_check_branch
      %649 = sbr.rel (%p647) target = $region60
    $region59: #{transformer_forward.1} parent=5 // pred_region
      // Predicated region
      $region61: #{transformer_forward.1} parent=59 // pred_check
        %p650 = pneg %p49
      $region62: #{transformer_forward.1} parent=59 // pred_check_branch
        %652 = sbr.rel (%p650) target = $region64
      $region63: #{transformer_forward.1} parent=59 // pred_region
        %p653 = scmp.lt.s32.totalorder %s29, 1
        %s654 = scalar_select %p653, %s29, 1
        %s655 = smul.addr %s654, 4
        %s656 = smul.addr %s655, 8
        %s657 = scalar_lea.vmem %s0, %s656
      $region64: #{transformer_forward.1} parent=59 // pred_fallthru
        _
      // Predicated region
      $region65: #{transformer_forward.1} parent=59 // pred_check
        %p658 = pneg %p75
      $region66: #{transformer_forward.1} parent=59 // pred_check_branch
        %660 = sbr.rel (%p658) target = $region68
      $region67: #{transformer_forward.1} parent=59 // pred_region
        %p661 = scmp.lt.s32.totalorder %s29, 1
        %s662 = scalar_select %p661, %s29, 1
        %s663 = smul.addr %s662, 4
        %s664 = smul.addr %s663, 8
        %s665 = scalar_lea.vmem %s1, %s664
      $region68: #{transformer_forward.1} parent=59 // pred_fallthru
        _
      // Predicated region
      $region69: #{transformer_forward.1} parent=59 // pred_check
        %p666 = pneg %p101
      $region70: #{transformer_forward.1} parent=59 // pred_check_branch
        %668 = sbr.rel (%p666) target = $region72
      $region71: #{transformer_forward.1} parent=59 // pred_region
        %p669 = scmp.lt.s32.totalorder %s29, 1
        %s670 = scalar_select %p669, %s29, 1
        %s671 = smul.addr %s670, 4
        %s672 = smul.addr %s671, 8
        %s673 = scalar_lea.vmem %s2, %s672
      $region72: #{transformer_forward.1} parent=59 // pred_fallthru
        _
      // Predicated region
      $region73: #{transformer_forward.1} parent=59 // pred_check
        %p674 = pneg %p127
      $region74: #{transformer_forward.1} parent=59 // pred_check_branch
        %676 = sbr.rel (%p674) target = $region76
      $region75: #{transformer_forward.1} parent=59 // pred_region
        %p677 = scmp.lt.s32.totalorder %s29, 1
        %s678 = scalar_select %p677, %s29, 1
        %s679 = smul.addr %s678, 4
        %s680 = smul.addr %s679, 8
        %s681 = scalar_lea.vmem %s3, %s680
      $region76: #{transformer_forward.1} parent=59 // pred_fallthru
        _
      // Predicated region
      $region77: #{transformer_forward.1} parent=59 // pred_check
        %p682 = pneg %p153
      $region78: #{transformer_forward.1} parent=59 // pred_check_branch
        %684 = sbr.rel (%p682) target = $region80
      $region79: #{transformer_forward.1} parent=59 // pred_region
        %p685 = scmp.lt.s32.totalorder %s29, 1
        %s686 = scalar_select %p685, %s29, 1
        %s687 = smul.addr %s686, 4
        %s688 = smul.addr %s687, 8
        %s689 = scalar_lea.vmem %s4, %s688
      $region80: #{transformer_forward.1} parent=59 // pred_fallthru
        _
      // Predicated region
      $region81: #{transformer_forward.1} parent=59 // pred_check
        %p690 = pneg %p179
      $region82: #{transformer_forward.1} parent=59 // pred_check_branch
        %692 = sbr.rel (%p690) target = $region84
      $region83: #{transformer_forward.1} parent=59 // pred_region
        %p693 = scmp.lt.s32.totalorder %s29, 1
        %s694 = scalar_select %p693, %s29, 1
        %s695 = smul.addr %s694, 4
        %s696 = smul.addr %s695, 8
        %s697 = scalar_lea.vmem %s5, %s696
      $region84: #{transformer_forward.1} parent=59 // pred_fallthru
        _
      // Predicated region
      $region85: #{transformer_forward.1} parent=59 // pred_check
        %p698 = pneg %p205
      $region86: #{transformer_forward.1} parent=59 // pred_check_branch
        %700 = sbr.rel (%p698) target = $region88
      $region87: #{transformer_forward.1} parent=59 // pred_region
        %p701 = scmp.lt.s32.totalorder %s29, 1
        %s702 = scalar_select %p701, %s29, 1
        %s703 = smul.addr %s702, 4
        %s704 = smul.addr %s703, 8
        %s705 = scalar_lea.vmem %s6, %s704
      $region88: #{transformer_forward.1} parent=59 // pred_fallthru
        _
      // Predicated region
      $region89: #{transformer_forward.1} parent=59 // pred_check
        %p706 = pneg %p231
      $region90: #{transformer_forward.1} parent=59 // pred_check_branch
        %708 = sbr.rel (%p706) target = $region92
      $region91: #{transformer_forward.1} parent=59 // pred_region
        %p709 = scmp.lt.s32.totalorder %s29, 1
        %s710 = scalar_select %p709, %s29, 1
        %s711 = smul.addr %s710, 4
        %s712 = smul.addr %s711, 8
        %s713 = scalar_lea.vmem %s7, %s712
      $region92: #{transformer_forward.1} parent=59 // pred_fallthru
        _
      // Predicated region
      $region93: #{transformer_forward.1} parent=59 // pred_check
        %p714 = pneg %p257
      $region94: #{transformer_forward.1} parent=59 // pred_check_branch
        %716 = sbr.rel (%p714) target = $region96
      $region95: #{transformer_forward.1} parent=59 // pred_region
        %p717 = scmp.lt.s32.totalorder %s29, 1
        %s718 = scalar_select %p717, %s29, 1
        %s719 = smul.addr %s718, 4
        %s720 = smul.addr %s719, 8
        %s721 = scalar_lea.vmem %s8, %s720
      $region96: #{transformer_forward.1} parent=59 // pred_fallthru
        _
      // Predicated region
      $region97: #{transformer_forward.1} parent=59 // pred_check
        %p722 = pneg %p283
      $region98: #{transformer_forward.1} parent=59 // pred_check_branch
        %724 = sbr.rel (%p722) target = $region100
      $region99: #{transformer_forward.1} parent=59 // pred_region
        %p725 = scmp.lt.s32.totalorder %s29, 1
        %s726 = scalar_select %p725, %s29, 1
        %s727 = smul.addr %s726, 4
        %s728 = smul.addr %s727, 8
        %s729 = scalar_lea.vmem %s9, %s728
      $region100: #{transformer_forward.1} parent=59 // pred_fallthru
        _
      // Predicated region
      $region101: #{transformer_forward.1} parent=59 // pred_check
        %p730 = pneg %p309
      $region102: #{transformer_forward.1} parent=59 // pred_check_branch
        %732 = sbr.rel (%p730) target = $region104
      $region103: #{transformer_forward.1} parent=59 // pred_region
        %p733 = scmp.lt.s32.totalorder %s29, 1
        %s734 = scalar_select %p733, %s29, 1
        %s735 = smul.addr %s734, 4
        %s736 = smul.addr %s735, 8
        %s737 = scalar_lea.vmem %s10, %s736
      $region104: #{transformer_forward.1} parent=59 // pred_fallthru
        _
      // Predicated region
      $region105: #{transformer_forward.1} parent=59 // pred_check
        %p738 = pneg %p335
      $region106: #{transformer_forward.1} parent=59 // pred_check_branch
        %740 = sbr.rel (%p738) target = $region108
      $region107: #{transformer_forward.1} parent=59 // pred_region
        %p741 = scmp.lt.s32.totalorder %s29, 1
        %s742 = scalar_select %p741, %s29, 1
        %s743 = smul.addr %s742, 4
        %s744 = smul.addr %s743, 8
        %s745 = scalar_lea.vmem %s11, %s744
      $region108: #{transformer_forward.1} parent=59 // pred_fallthru
        _
    $region60: #{transformer_forward.1} parent=5 // pred_fallthru
      _
    %p746 = scmp.le.s32.totalorder 1, %s29
    %p747 = scmp.lt.s32.totalorder %s29, 3
    %p748 = pnand %p746, %p747
    %p749 = pneg %p748
    // Predicated region
    $region109: #{transformer_forward.1} parent=5 // pred_check
      _
    $region110: #{transformer_forward.1} parent=5 // pred_check_branch
      %751 = sbr.rel (%p748) target = $region112
    $region111: #{transformer_forward.1} parent=5 // pred_region
      %s752 = ssub.s32 %s29, 1
      %p753 = scmp.lt.s32.totalorder %s34, 1
      %s754 = scalar_select %p753, %s34, 1
      %s755 = smul.addr %s754, 4
      %s756 = smul.addr %s755, 8
      %s757 = scalar_lea.vmem %s0, %s756
      %p758 = pneg %p55
      %p759 = pneg %p52
      %p760 = scmp.lt.s32.totalorder %s34, 1
      %s761 = scalar_select %p760, %s34, 1
      %s762 = smul.addr %s761, 4
      %s763 = smul.addr %s762, 8
      %s764 = scalar_lea.vmem %s1, %s763
      %p765 = pneg %p81
      %p766 = pneg %p78
      %p767 = scmp.lt.s32.totalorder %s34, 1
      %s768 = scalar_select %p767, %s34, 1
      %s769 = smul.addr %s768, 4
      %s770 = smul.addr %s769, 8
      %s771 = scalar_lea.vmem %s2, %s770
      %p772 = pneg %p107
      %p773 = pneg %p104
      %p774 = scmp.lt.s32.totalorder %s34, 1
      %s775 = scalar_select %p774, %s34, 1
      %s776 = smul.addr %s775, 4
      %s777 = smul.addr %s776, 8
      %s778 = scalar_lea.vmem %s3, %s777
      %p779 = pneg %p133
      %p780 = pneg %p130
      %p781 = scmp.lt.s32.totalorder %s34, 1
      %s782 = scalar_select %p781, %s34, 1
      %s783 = smul.addr %s782, 4
      %s784 = smul.addr %s783, 8
      %s785 = scalar_lea.vmem %s4, %s784
      %p786 = pneg %p159
      %p787 = pneg %p156
      %p788 = scmp.lt.s32.totalorder %s34, 1
      %s789 = scalar_select %p788, %s34, 1
      %s790 = smul.addr %s789, 4
      %s791 = smul.addr %s790, 8
      %s792 = scalar_lea.vmem %s5, %s791
      %p793 = pneg %p185
      %p794 = pneg %p182
      %p795 = scmp.lt.s32.totalorder %s34, 1
      %s796 = scalar_select %p795, %s34, 1
      %s797 = smul.addr %s796, 4
      %s798 = smul.addr %s797, 8
      %s799 = scalar_lea.vmem %s6, %s798
      %p800 = pneg %p211
      %p801 = pneg %p208
      %p802 = scmp.lt.s32.totalorder %s34, 1
      %s803 = scalar_select %p802, %s34, 1
      %s804 = smul.addr %s803, 4
      %s805 = smul.addr %s804, 8
      %s806 = scalar_lea.vmem %s7, %s805
      %p807 = pneg %p237
      %p808 = pneg %p234
      %p809 = scmp.lt.s32.totalorder %s34, 1
      %s810 = scalar_select %p809, %s34, 1
      %s811 = smul.addr %s810, 4
      %s812 = smul.addr %s811, 8
      %s813 = scalar_lea.vmem %s8, %s812
      %p814 = pneg %p263
      %p815 = pneg %p260
      %p816 = scmp.lt.s32.totalorder %s34, 1
      %s817 = scalar_select %p816, %s34, 1
      %s818 = smul.addr %s817, 4
      %s819 = smul.addr %s818, 8
      %s820 = scalar_lea.vmem %s9, %s819
      %p821 = pneg %p289
      %p822 = pneg %p286
      %p823 = scmp.lt.s32.totalorder %s34, 1
      %s824 = scalar_select %p823, %s34, 1
      %s825 = smul.addr %s824, 4
      %s826 = smul.addr %s825, 8
      %s827 = scalar_lea.vmem %s10, %s826
      %p828 = pneg %p315
      %p829 = pneg %p312
      %p830 = scmp.lt.s32.totalorder %s34, 1
      %s831 = scalar_select %p830, %s34, 1
      %s832 = smul.addr %s831, 4
      %s833 = smul.addr %s832, 8
      %s834 = scalar_lea.vmem %s11, %s833
      %p835 = pneg %p341
      %p836 = pneg %p338
      %p837 = pneg %p362
      %p838 = pneg %p359
      %p839 = pneg %p383
      %p840 = pneg %p380
      %p841 = pneg %p404
      %p842 = pneg %p401
      %p843 = pneg %p425
      %p844 = pneg %p422
      %p845 = pneg %p446
      %p846 = pneg %p443
      %p847 = pneg %p467
      %p848 = pneg %p464
      %p849 = pneg %p488
      %p850 = pneg %p485
      %p851 = pneg %p509
      %p852 = pneg %p506
      %p853 = pneg %p530
      %p854 = pneg %p527
      %p855 = pneg %p551
      %p856 = pneg %p548
      %p857 = pneg %p572
      %p858 = pneg %p569
      %p859 = pneg %p598
      %p860 = pneg %p595
      %p861 = scmp.lt.s32.totalorder %s34, 1
      %s862 = scalar_select %p861, %s34, 1
      %s863 = smul.addr %s862, 4
      %s864 = smul.addr %s863, 8
      %s865 = scalar_lea.vmem %s23, %s864
      %p866 = scmp.lt.s32.totalorder %s34, 1
      %s867 = scalar_select %p866, %s34, 1
      %s868 = smul.addr %s867, 4
      %s869 = smul.addr %s868, 8
      %s870 = scalar_lea.vmem %s0, %s869
      %p871 = scmp.lt.s32.totalorder %s34, 1
      %s872 = scalar_select %p871, %s34, 1
      %s873 = smul.addr %s872, 4
      %s874 = smul.addr %s873, 8
      %s875 = scalar_lea.vmem %s1, %s874
      %p876 = scmp.lt.s32.totalorder %s34, 1
      %s877 = scalar_select %p876, %s34, 1
      %s878 = smul.addr %s877, 4
      %s879 = smul.addr %s878, 8
      %s880 = scalar_lea.vmem %s2, %s879
      %p881 = scmp.lt.s32.totalorder %s34, 1
      %s882 = scalar_select %p881, %s34, 1
      %s883 = smul.addr %s882, 4
      %s884 = smul.addr %s883, 8
      %s885 = scalar_lea.vmem %s3, %s884
      %p886 = scmp.lt.s32.totalorder %s34, 1
      %s887 = scalar_select %p886, %s34, 1
      %s888 = smul.addr %s887, 4
      %s889 = smul.addr %s888, 8
      %s890 = scalar_lea.vmem %s4, %s889
      %p891 = scmp.lt.s32.totalorder %s34, 1
      %s892 = scalar_select %p891, %s34, 1
      %s893 = smul.addr %s892, 4
      %s894 = smul.addr %s893, 8
      %s895 = scalar_lea.vmem %s5, %s894
      %p896 = scmp.lt.s32.totalorder %s34, 1
      %s897 = scalar_select %p896, %s34, 1
      %s898 = smul.addr %s897, 4
      %s899 = smul.addr %s898, 8
      %s900 = scalar_lea.vmem %s6, %s899
      %p901 = scmp.lt.s32.totalorder %s34, 1
      %s902 = scalar_select %p901, %s34, 1
      %s903 = smul.addr %s902, 4
      %s904 = smul.addr %s903, 8
      %s905 = scalar_lea.vmem %s7, %s904
      %p906 = scmp.lt.s32.totalorder %s34, 1
      %s907 = scalar_select %p906, %s34, 1
      %s908 = smul.addr %s907, 4
      %s909 = smul.addr %s908, 8
      %s910 = scalar_lea.vmem %s8, %s909
      %p911 = scmp.lt.s32.totalorder %s34, 1
      %s912 = scalar_select %p911, %s34, 1
      %s913 = smul.addr %s912, 4
      %s914 = smul.addr %s913, 8
      %s915 = scalar_lea.vmem %s9, %s914
      %p916 = scmp.lt.s32.totalorder %s34, 1
      %s917 = scalar_select %p916, %s34, 1
      %s918 = smul.addr %s917, 4
      %s919 = smul.addr %s918, 8
      %s920 = scalar_lea.vmem %s10, %s919
      %p921 = scmp.lt.s32.totalorder %s34, 1
      %s922 = scalar_select %p921, %s34, 1
      %s923 = smul.addr %s922, 4
      %s924 = smul.addr %s923, 8
      %s925 = scalar_lea.vmem %s11, %s924
      %p926 = scmp.lt.s32.totalorder %s34, 1
      %s927 = scalar_select %p926, %s34, 1
      %s928 = smul.addr %s927, 4
      %s929 = smul.addr %s928, 8
      %s930 = scalar_lea.vmem %s23, %s929
      %v932 = vld [vmem:[%s870] sm:$0xff]
      %v933 = vld [vmem:[%s870 + $0x8] sm:$0xff]
      %v934 = vld [vmem:[%s870 + $0x10] sm:$0xff]
      %v935 = vld [vmem:[%s870 + $0x18] sm:$0xff]
      %v936 = vld [vmem:[%s875] sm:$0xff]
      %v937 = vld [vmem:[%s875 + $0x8] sm:$0xff]
      %v938 = vld [vmem:[%s875 + $0x10] sm:$0xff]
      %v939 = vld [vmem:[%s875 + $0x18] sm:$0xff]
      %v940 = vld [vmem:[%s880] sm:$0xff]
      %v941 = vld [vmem:[%s880 + $0x8] sm:$0xff]
      %v942 = vld [vmem:[%s880 + $0x10] sm:$0xff]
      %v943 = vld [vmem:[%s880 + $0x18] sm:$0xff]
      %v944 = vld [vmem:[%s885] sm:$0xff]
      %v945 = vld [vmem:[%s885 + $0x8] sm:$0xff]
      %v946 = vld [vmem:[%s885 + $0x10] sm:$0xff]
      %v947 = vld [vmem:[%s885 + $0x18] sm:$0xff]
      %v948 = vld [vmem:[%s890] sm:$0xff]
      %v949 = vld [vmem:[%s890 + $0x8] sm:$0xff]
      %v950 = vld [vmem:[%s890 + $0x10] sm:$0xff]
      %v951 = vld [vmem:[%s890 + $0x18] sm:$0xff]
      %v952 = vld [vmem:[%s895] sm:$0xff]
      %v953 = vld [vmem:[%s895 + $0x8] sm:$0xff]
      %v954 = vld [vmem:[%s895 + $0x10] sm:$0xff]
      %v955 = vld [vmem:[%s895 + $0x18] sm:$0xff]
      %v956 = vld [vmem:[%s12] sm:$0xff]
      %v957 = vld [vmem:[%s12 + $0x8] sm:$0xff]
      %v958 = vld [vmem:[%s12 + $0x10] sm:$0xff]
      %v959 = vld [vmem:[%s12 + $0x18] sm:$0xff]
      %v960 = vld [vmem:[%s13] sm:$0xff]
      %v961 = vld [vmem:[%s13 + $0x8] sm:$0xff]
      %v962 = vld [vmem:[%s13 + $0x10] sm:$0xff]
      %v963 = vld [vmem:[%s13 + $0x18] sm:$0xff]
      %v964 = vld [vmem:[%s14] sm:$0xff]
      %v965 = vld [vmem:[%s14 + $0x8] sm:$0xff]
      %v966 = vld [vmem:[%s14 + $0x10] sm:$0xff]
      %v967 = vld [vmem:[%s14 + $0x18] sm:$0xff]
      %v968 = vld [vmem:[%s15] sm:$0xff]
      %v969 = vld [vmem:[%s15 + $0x8] sm:$0xff]
      %v970 = vld [vmem:[%s15 + $0x10] sm:$0xff]
      %v971 = vld [vmem:[%s15 + $0x18] sm:$0xff]
      %v972 = vld [vmem:[%s15 + $0x20] sm:$0xff]
      %v973 = vld [vmem:[%s15 + $0x28] sm:$0xff]
      %v974 = vld [vmem:[%s15 + $0x30] sm:$0xff]
      %v975 = vld [vmem:[%s15 + $0x38] sm:$0xff]
      %v976 = vld [vmem:[%s15 + $0x40] sm:$0xff]
      %v977 = vld [vmem:[%s15 + $0x48] sm:$0xff]
      %v978 = vld [vmem:[%s15 + $0x50] sm:$0xff]
      %v979 = vld [vmem:[%s15 + $0x58] sm:$0xff]
      %981 = vset.pattern.permute.xlu0 0
      %982 = vperm.xlu0 %981, %v968
      %v983 = vpop.permute.xlu0 %982
      %986 = vset.pattern.permute.xlu0 0
      %987 = vperm.xlu0 %986, %v969
      %v988 = vpop.permute.xlu0 %987
      %991 = vset.pattern.permute.xlu0 0
      %992 = vperm.xlu0 %991, %v970
      %v993 = vpop.permute.xlu0 %992
      %996 = vset.pattern.permute.xlu0 0
      %997 = vperm.xlu0 %996, %v971
      %v998 = vpop.permute.xlu0 %997
      %vm1000 = vcmask 261120
      %v1002 = vsel %vm1000, %v956, 0
      %v1005 = vsel %vm1000, %v957, 0
      %v1008 = vsel %vm1000, %v958, 0
      %v1011 = vsel %vm1000, %v959, 0
      %1013 = vmatpush.msra.mxu0 0.0
      %1014 = vmatpush.msra.mxu0 0.0
      %1015 = vmatpush.msra.mxu0 0.0
      %1016 = vmatpush.msra.mxu0 0.0
      %1017 = vmatpush.msra.mxu0 0.0
      %1018 = vmatpush.msra.mxu0 0.0
      %1019 = vmatpush.msra.mxu0 0.0
      %1020 = vmatpush.msra.mxu0 0.0
      %1021 = vmatpush.msra.mxu0 0.0
      %1022 = vmatpush.msra.mxu0 0.0
      %1023 = vmatpush.msra.mxu0 0.0
      %1024 = vmatpush.msra.mxu0 0.0
      %1025 = vmatpush.msra.mxu0 %v943
      %1026 = vmatpush.msra.mxu0 %v942
      %1027 = vmatpush.msra.mxu0 %v941
      %1028 = vmatpush.msra.mxu0 %v940
      %1029 = vmatmul.f32.gmra.mxu0 %v1002
      %v1030 = vpop.f32.mrf.mxu0
      %v1031 = vadd.f32 %v983, %v1030
      %1032 = vmatmul.f32.gmra.mxu0 %v1005
      %v1033 = vpop.f32.mrf.mxu0
      %v1034 = vadd.f32 %v988, %v1033
      %1035 = vmatmul.f32.gmra.mxu0 %v1008
      %v1036 = vpop.f32.mrf.mxu0
      %v1037 = vadd.f32 %v993, %v1036
      %1038 = vmatmul.f32.gmra.mxu0 %v1011
      %v1039 = vpop.f32.mrf.mxu0
      %v1040 = vadd.f32 %v998, %v1039
      %1041 = vdwg.mxu0
      %1043 = vset.pattern.permute.xlu0 0
      %1044 = vperm.xlu0 %1043, %v972
      %v1045 = vpop.permute.xlu0 %1044
      %1048 = vset.pattern.permute.xlu0 0
      %1049 = vperm.xlu0 %1048, %v973
      %v1050 = vpop.permute.xlu0 %1049
      %1053 = vset.pattern.permute.xlu0 0
      %1054 = vperm.xlu0 %1053, %v974
      %v1055 = vpop.permute.xlu0 %1054
      %1058 = vset.pattern.permute.xlu0 0
      %1059 = vperm.xlu0 %1058, %v975
      %v1060 = vpop.permute.xlu0 %1059
      %v1063 = vsel %vm1000, %v960, 0
      %v1066 = vsel %vm1000, %v961, 0
      %v1069 = vsel %vm1000, %v962, 0
      %v1072 = vsel %vm1000, %v963, 0
      %1074 = vmatpush.msra.mxu0 0.0
      %1075 = vmatpush.msra.mxu0 0.0
      %1076 = vmatpush.msra.mxu0 0.0
      %1077 = vmatpush.msra.mxu0 0.0
      %1078 = vmatpush.msra.mxu0 0.0
      %1079 = vmatpush.msra.mxu0 0.0
      %1080 = vmatpush.msra.mxu0 0.0
      %1081 = vmatpush.msra.mxu0 0.0
      %1082 = vmatpush.msra.mxu0 0.0
      %1083 = vmatpush.msra.mxu0 0.0
      %1084 = vmatpush.msra.mxu0 0.0
      %1085 = vmatpush.msra.mxu0 0.0
      %1086 = vmatpush.msra.mxu0 %v947
      %1087 = vmatpush.msra.mxu0 %v946
      %1088 = vmatpush.msra.mxu0 %v945
      %1089 = vmatpush.msra.mxu0 %v944
      %1090 = vmatmul.f32.gmra.mxu0 %v1063
      %v1091 = vpop.f32.mrf.mxu0
      %v1092 = vadd.f32 %v1045, %v1091
      %1093 = vmatmul.f32.gmra.mxu0 %v1066
      %v1094 = vpop.f32.mrf.mxu0
      %v1095 = vadd.f32 %v1050, %v1094
      %1096 = vmatmul.f32.gmra.mxu0 %v1069
      %v1097 = vpop.f32.mrf.mxu0
      %v1098 = vadd.f32 %v1055, %v1097
      %1099 = vmatmul.f32.gmra.mxu0 %v1072
      %v1100 = vpop.f32.mrf.mxu0
      %v1101 = vadd.f32 %v1060, %v1100
      %1102 = vdwg.mxu0
      %1104 = vset.pattern.permute.xlu0 0
      %1105 = vperm.xlu0 %1104, %v976
      %v1106 = vpop.permute.xlu0 %1105
      %1109 = vset.pattern.permute.xlu0 0
      %1110 = vperm.xlu0 %1109, %v977
      %v1111 = vpop.permute.xlu0 %1110
      %1114 = vset.pattern.permute.xlu0 0
      %1115 = vperm.xlu0 %1114, %v978
      %v1116 = vpop.permute.xlu0 %1115
      %1119 = vset.pattern.permute.xlu0 0
      %1120 = vperm.xlu0 %1119, %v979
      %v1121 = vpop.permute.xlu0 %1120
      %v1124 = vsel %vm1000, %v964, 0
      %v1127 = vsel %vm1000, %v965, 0
      %v1130 = vsel %vm1000, %v966, 0
      %v1133 = vsel %vm1000, %v967, 0
      %1135 = vmatpush.msra.mxu0 0.0
      %1136 = vmatpush.msra.mxu0 0.0
      %1137 = vmatpush.msra.mxu0 0.0
      %1138 = vmatpush.msra.mxu0 0.0
      %1139 = vmatpush.msra.mxu0 0.0
      %1140 = vmatpush.msra.mxu0 0.0
      %1141 = vmatpush.msra.mxu0 0.0
      %1142 = vmatpush.msra.mxu0 0.0
      %1143 = vmatpush.msra.mxu0 0.0
      %1144 = vmatpush.msra.mxu0 0.0
      %1145 = vmatpush.msra.mxu0 0.0
      %1146 = vmatpush.msra.mxu0 0.0
      %1147 = vmatpush.msra.mxu0 %v939
      %1148 = vmatpush.msra.mxu0 %v938
      %1149 = vmatpush.msra.mxu0 %v937
      %1150 = vmatpush.msra.mxu0 %v936
      %1151 = vmatmul.f32.gmra.mxu0 %v1124
      %v1152 = vpop.f32.mrf.mxu0
      %v1153 = vadd.f32 %v1106, %v1152
      %1154 = vmatmul.f32.gmra.mxu0 %v1127
      %v1155 = vpop.f32.mrf.mxu0
      %v1156 = vadd.f32 %v1111, %v1155
      %1157 = vmatmul.f32.gmra.mxu0 %v1130
      %v1158 = vpop.f32.mrf.mxu0
      %v1159 = vadd.f32 %v1116, %v1158
      %1160 = vmatmul.f32.gmra.mxu0 %v1133
      %v1161 = vpop.f32.mrf.mxu0
      %v1162 = vadd.f32 %v1121, %v1161
      %1163 = vdwg.mxu0
      %1164 = vxpose.xlu0.b32.start [1/16] %v1092, 128
      %1165 = vxpose.xlu0.b32.cont [2/16] %v1095, 128
      %1166 = vxpose.xlu0.b32.cont [3/16] %v1098, 128
      %1167 = vxpose.xlu0.b32.cont [4/16] %v1101, 128
      %1168 = vxpose.xlu0.b32.cont [5/16] 0.0, 128
      %1169 = vxpose.xlu0.b32.cont [6/16] 0.0, 128
      %1170 = vxpose.xlu0.b32.cont [7/16] 0.0, 128
      %1171 = vxpose.xlu0.b32.cont [8/16] 0.0, 128
      %1172 = vxpose.xlu0.b32.cont [9/16] 0.0, 128
      %1173 = vxpose.xlu0.b32.cont [10/16] 0.0, 128
      %1174 = vxpose.xlu0.b32.cont [11/16] 0.0, 128
      %1175 = vxpose.xlu0.b32.cont [12/16] 0.0, 128
      %1176 = vxpose.xlu0.b32.cont [13/16] 0.0, 128
      %1177 = vxpose.xlu0.b32.cont [14/16] 0.0, 128
      %1178 = vxpose.xlu0.b32.cont [15/16] 0.0, 128
      %1179 = vxpose.xlu0.b32.end [16/16] 0.0, 128
      %v1180 = vpop.trf.xlu0
      %v1181 = vpop.trf.xlu0
      %v1182 = vpop.trf.xlu0
      %v1183 = vpop.trf.xlu0
      %v1184 = vpop.trf.xlu0
      %v1185 = vpop.trf.xlu0
      %v1186 = vpop.trf.xlu0
      %v1187 = vpop.trf.xlu0
      %v1188 = vpop.trf.xlu0
      %v1189 = vpop.trf.xlu0
      %v1190 = vpop.trf.xlu0
      %v1191 = vpop.trf.xlu0
      %v1192 = vpop.trf.xlu0
      %v1193 = vpop.trf.xlu0
      %v1194 = vpop.trf.xlu0
      %v1195 = vpop.trf.xlu0
      %v1197 = vsel %vm1000, %v1180, 0
      %v1200 = vsel %vm1000, %v1181, 0
      %1202 = vmatpush.msra.mxu0 0.0
      %1203 = vmatpush.msra.mxu0 0.0
      %1204 = vmatpush.msra.mxu0 0.0
      %1205 = vmatpush.msra.mxu0 0.0
      %1206 = vmatpush.msra.mxu0 0.0
      %1207 = vmatpush.msra.mxu0 0.0
      %1208 = vmatpush.msra.mxu0 0.0
      %1209 = vmatpush.msra.mxu0 0.0
      %1210 = vmatpush.msra.mxu0 0.0
      %1211 = vmatpush.msra.mxu0 0.0
      %1212 = vmatpush.msra.mxu0 0.0
      %1213 = vmatpush.msra.mxu0 0.0
      %1214 = vmatpush.msra.mxu0 %v1040
      %1215 = vmatpush.msra.mxu0 %v1037
      %1216 = vmatpush.msra.mxu0 %v1034
      %1217 = vmatpush.msra.mxu0 %v1031
      %1218 = vmatmul.f32.gmra.mxu0 %v1197
      %v1219 = vpop.f32.mrf.mxu0
      %v1220 = vadd.f32 0.0, %v1219
      %1221 = vmatmul.f32.gmra.mxu0 %v1200
      %v1222 = vpop.f32.mrf.mxu0
      %v1223 = vadd.f32 0.0, %v1222
      %1224 = vdwg.mxu0
      %vm1225 = vcmask 130048
      %v1226 = vsel %vm1225, %v1220, -inf
      %v1227 = vsel %vm1225, %v1223, -inf
      %v1228 = vmax.f32 %v1226, %v1227
      %v1229 = vrot.slane %v1228, 4
      %v1230 = vmax.f32 %v1228, %v1229
      %v1231 = vrot.slane %v1230, 2
      %v1232 = vmax.f32 %v1230, %v1231
      %v1233 = vrot.slane %v1232, 1
      %v1234 = vmax.f32 %v1232, %v1233
      %v1235 = vsub.f32 %v1220, %v1234
      %v1236 = vsub.f32 %v1223, %v1234
      %v1237 = vmul.f32 %v1235, 1.442695
      %v1238 = vpow.pop %v1237
      %v1239 = vmul.f32 %v1236, 1.442695
      %v1240 = vpow.pop %v1239
      %v1241 = vsel %vm1225, %v1238, 0.0
      %v1242 = vsel %vm1225, %v1240, 0.0
      %v1243 = vadd.f32 %v1241, %v1242
      %v1244 = vrot.slane %v1243, 4
      %v1245 = vadd.f32 %v1243, %v1244
      %v1246 = vrot.slane %v1245, 2
      %v1247 = vadd.f32 %v1245, %v1246
      %v1248 = vrot.slane %v1247, 1
      %v1249 = vadd.f32 %v1247, %v1248
      %v1250 = vrcp.pop %v1249
      %v1251 = vmul.f32 %v1249, %v1250
      %v1252 = vsub.f32 1.0, %v1251
      %v1253 = vmul.f32 %v1250, %v1252
      %v1254 = vadd.f32 %v1250, %v1253
      %vm1255 = vweird.f32 %v1249
      %vm1256 = vweird.f32 %v1250
      %vm1257 = vmor %vm1255, %vm1256
      %v1258 = vsel %vm1257, %v1250, %v1254
      %v1259 = vand.u32 2147483647, %v1249
      %vm1260 = vcmp.eq.f32.partialorder %v1259, 8.507059e+37
      %v1261 = vand.u32 %v1249, 2147483648
      %v1262 = vor.u32 1.1754944e-38, %v1261
      %v1263 = vsel %vm1260, %v1262, %v1258
      %v1264 = vmul.f32 %v1238, %v1263
      %v1265 = vmul.f32 %v1240, %v1263
      %v1266 = vmul.f32 %v1153, %v1153
      %v1267 = vmul.f32 %v1156, %v1156
      %v1268 = vmul.f32 %v1159, %v1159
      %v1269 = vmul.f32 %v1162, %v1162
      %v1270 = vpack.c.bf16 %v1156, %v1153
      %v1271 = vpack.c.bf16 %v1162, %v1159
      %v1272 = vpack.c.bf16 %v1267, %v1266
      %v1273 = vpack.c.bf16 %v1269, %v1268
      %v1274 = vpack.c.bf16 %v1265, %v1264
      %v1276 = vsel %vm1225, %v1270, 0
      %v1279 = vsel %vm1225, %v1271, 0
      %v1282 = vsel %vm1225, %v1272, 0
      %v1285 = vsel %vm1225, %v1273, 0
      %1287 = vmatpush.bf16.msra.mxu0 0
      %1288 = vmatpush.bf16.msra.mxu0 0
      %1289 = vmatpush.bf16.msra.mxu0 0
      %1290 = vmatpush.bf16.msra.mxu0 0
      %1291 = vmatpush.bf16.msra.mxu0 0
      %1292 = vmatpush.bf16.msra.mxu0 0
      %1293 = vmatpush.bf16.msra.mxu0 0
      %1294 = vmatpush.bf16.msra.mxu0 %v1274
      %1295 = vmatmul.bf16.gmra.mxu0 %v1276
      %v1296 = vpop.f32.mrf.mxu0
      %v1297 = vadd.f32 0.0, %v1296
      %v1298 = vpop.f32.mrf.mxu0
      %v1299 = vadd.f32 0.0, %v1298
      %1300 = vmatmul.bf16.gmra.mxu0 %v1279
      %v1301 = vpop.f32.mrf.mxu0
      %v1302 = vadd.f32 0.0, %v1301
      %v1303 = vpop.f32.mrf.mxu0
      %v1304 = vadd.f32 0.0, %v1303
      %1305 = vmatmul.bf16.gmra.mxu0 %v1282
      %v1306 = vpop.f32.mrf.mxu0
      %v1307 = vadd.f32 0.0, %v1306
      %v1308 = vpop.f32.mrf.mxu0
      %v1309 = vadd.f32 0.0, %v1308
      %1310 = vmatmul.bf16.gmra.mxu0 %v1285
      %v1311 = vpop.f32.mrf.mxu0
      %v1312 = vadd.f32 0.0, %v1311
      %v1313 = vpop.f32.mrf.mxu0
      %v1314 = vadd.f32 0.0, %v1313
      %1315 = vdwg.mxu0
      %v1316 = vmul.f32 %v1297, %v1297
      %v1317 = vmul.f32 %v1299, %v1299
      %v1318 = vmul.f32 %v1302, %v1302
      %v1319 = vmul.f32 %v1304, %v1304
      %v1320 = vsub.f32 %v1307, %v1316
      %v1321 = vsub.f32 %v1309, %v1317
      %v1322 = vsub.f32 %v1312, %v1318
      %v1323 = vsub.f32 %v1314, %v1319
      %v1324 = vmax.f32 %v1320, 0.0
      %v1325 = vmax.f32 %v1321, 0.0
      %v1326 = vmax.f32 %v1322, 0.0
      %v1327 = vmax.f32 %v1323, 0.0
      %v1328 = vrsqrt.pop %v1324
      %v1329 = vmul.f32 %v1328, %v1324
      %v1330 = vmul.f32 %v1329, %v1328
      %v1331 = vmul.f32 0.5, %v1330
      %v1332 = vsub.f32 1.5, %v1331
      %v1333 = vmul.f32 %v1328, %v1332
      %v1334 = vmul.f32 %v1324, %v1333
      %vm1335 = vcmp.eq.f32.partialorder %v1324, inf
      %v1336 = vsel %vm1335, %v1324, %v1334
      %vm1337 = vcmp.eq.f32.partialorder %v1324, 0.0
      %v1338 = vand.u32 %v1324, 2147483648
      %v1339 = vsel %vm1337, %v1338, %v1336
      %v1340 = vrsqrt.pop %v1325
      %v1341 = vmul.f32 %v1340, %v1325
      %v1342 = vmul.f32 %v1341, %v1340
      %v1343 = vmul.f32 0.5, %v1342
      %v1344 = vsub.f32 1.5, %v1343
      %v1345 = vmul.f32 %v1340, %v1344
      %v1346 = vmul.f32 %v1325, %v1345
      %vm1347 = vcmp.eq.f32.partialorder %v1325, inf
      %v1348 = vsel %vm1347, %v1325, %v1346
      %vm1349 = vcmp.eq.f32.partialorder %v1325, 0.0
      %v1350 = vand.u32 %v1325, 2147483648
      %v1351 = vsel %vm1349, %v1350, %v1348
      %v1352 = vrsqrt.pop %v1326
      %v1353 = vmul.f32 %v1352, %v1326
      %v1354 = vmul.f32 %v1353, %v1352
      %v1355 = vmul.f32 0.5, %v1354
      %v1356 = vsub.f32 1.5, %v1355
      %v1357 = vmul.f32 %v1352, %v1356
      %v1358 = vmul.f32 %v1326, %v1357
      %vm1359 = vcmp.eq.f32.partialorder %v1326, inf
      %v1360 = vsel %vm1359, %v1326, %v1358
      %vm1361 = vcmp.eq.f32.partialorder %v1326, 0.0
      %v1362 = vand.u32 %v1326, 2147483648
      %v1363 = vsel %vm1361, %v1362, %v1360
      %v1364 = vrsqrt.pop %v1327
      %v1365 = vmul.f32 %v1364, %v1327
      %v1366 = vmul.f32 %v1365, %v1364
      %v1367 = vmul.f32 0.5, %v1366
      %v1368 = vsub.f32 1.5, %v1367
      %v1369 = vmul.f32 %v1364, %v1368
      %v1370 = vmul.f32 %v1327, %v1369
      %vm1371 = vcmp.eq.f32.partialorder %v1327, inf
      %v1372 = vsel %vm1371, %v1327, %v1370
      %vm1373 = vcmp.eq.f32.partialorder %v1327, 0.0
      %v1374 = vand.u32 %v1327, 2147483648
      %v1375 = vsel %vm1373, %v1374, %v1372
      %1377 = vset.pattern.permute.xlu0 0
      %1378 = vperm.xlu0 %1377, %v948
      %v1379 = vpop.permute.xlu0 %1378
      %1382 = vset.pattern.permute.xlu0 0
      %1383 = vperm.xlu0 %1382, %v949
      %v1384 = vpop.permute.xlu0 %1383
      %1387 = vset.pattern.permute.xlu0 0
      %1388 = vperm.xlu0 %1387, %v950
      %v1389 = vpop.permute.xlu0 %1388
      %1392 = vset.pattern.permute.xlu0 0
      %1393 = vperm.xlu0 %1392, %v951
      %v1394 = vpop.permute.xlu0 %1393
      %v1396 = vsub.f32 %v932, %v1379
      %v1397 = vsub.f32 %v933, %v1384
      %v1398 = vsub.f32 %v934, %v1389
      %v1399 = vsub.f32 %v935, %v1394
      %1401 = vset.pattern.permute.xlu0 0
      %1402 = vperm.xlu0 %1401, %v952
      %v1403 = vpop.permute.xlu0 %1402
      %1406 = vset.pattern.permute.xlu0 0
      %1407 = vperm.xlu0 %1406, %v953
      %v1408 = vpop.permute.xlu0 %1407
      %1411 = vset.pattern.permute.xlu0 0
      %1412 = vperm.xlu0 %1411, %v954
      %v1413 = vpop.permute.xlu0 %1412
      %1416 = vset.pattern.permute.xlu0 0
      %1417 = vperm.xlu0 %1416, %v955
      %v1418 = vpop.permute.xlu0 %1417
      %v1420 = vmul.f32 %v1396, %v1403
      %v1421 = vmul.f32 %v1397, %v1408
      %v1422 = vmul.f32 %v1398, %v1413
      %v1423 = vmul.f32 %v1399, %v1418
      %v1424 = vmul.f32 %v1339, %v1420
      %v1425 = vmul.f32 %v1351, %v1421
      %v1426 = vmul.f32 %v1363, %v1422
      %v1427 = vmul.f32 %v1375, %v1423
      %v1428 = vadd.f32 %v1424, %v1297
      %v1429 = vadd.f32 %v1425, %v1299
      %v1430 = vadd.f32 %v1426, %v1302
      %v1431 = vadd.f32 %v1427, %v1304
      %v1432 = vld [vmem:[%s900] sm:$0xff]
      %v1433 = vld [vmem:[%s900 + $0x8] sm:$0xff]
      %v1434 = vld [vmem:[%s900 + $0x10] sm:$0xff]
      %v1435 = vld [vmem:[%s900 + $0x18] sm:$0xff]
      %v1436 = vld [vmem:[%s905] sm:$0xff]
      %v1437 = vld [vmem:[%s905 + $0x8] sm:$0xff]
      %v1438 = vld [vmem:[%s905 + $0x10] sm:$0xff]
      %v1439 = vld [vmem:[%s905 + $0x18] sm:$0xff]
      %v1440 = vld [vmem:[%s910] sm:$0xff]
      %v1441 = vld [vmem:[%s910 + $0x8] sm:$0xff]
      %v1442 = vld [vmem:[%s910 + $0x10] sm:$0xff]
      %v1443 = vld [vmem:[%s910 + $0x18] sm:$0xff]
      %v1444 = vld [vmem:[%s915] sm:$0xff]
      %v1445 = vld [vmem:[%s915 + $0x8] sm:$0xff]
      %v1446 = vld [vmem:[%s915 + $0x10] sm:$0xff]
      %v1447 = vld [vmem:[%s915 + $0x18] sm:$0xff]
      %v1448 = vld [vmem:[%s920] sm:$0xff]
      %v1449 = vld [vmem:[%s920 + $0x8] sm:$0xff]
      %v1450 = vld [vmem:[%s920 + $0x10] sm:$0xff]
      %v1451 = vld [vmem:[%s920 + $0x18] sm:$0xff]
      %v1452 = vld [vmem:[%s925] sm:$0xff]
      %v1453 = vld [vmem:[%s925 + $0x8] sm:$0xff]
      %v1454 = vld [vmem:[%s925 + $0x10] sm:$0xff]
      %v1455 = vld [vmem:[%s925 + $0x18] sm:$0xff]
      %v1456 = vld [vmem:[%s16] sm:$0xff]
      %v1457 = vld [vmem:[%s16 + $0x8] sm:$0xff]
      %v1458 = vld [vmem:[%s16 + $0x10] sm:$0xff]
      %v1459 = vld [vmem:[%s16 + $0x18] sm:$0xff]
      %v1460 = vld [vmem:[%s17] sm:$0xff]
      %v1461 = vld [vmem:[%s17 + $0x8] sm:$0xff]
      %v1462 = vld [vmem:[%s17 + $0x10] sm:$0xff]
      %v1463 = vld [vmem:[%s17 + $0x18] sm:$0xff]
      %v1464 = vld [vmem:[%s18] sm:$0xff]
      %v1465 = vld [vmem:[%s18 + $0x8] sm:$0xff]
      %v1466 = vld [vmem:[%s18 + $0x10] sm:$0xff]
      %v1467 = vld [vmem:[%s18 + $0x18] sm:$0xff]
      %v1468 = vld [vmem:[%s19] sm:$0xff]
      %v1469 = vld [vmem:[%s19 + $0x8] sm:$0xff]
      %v1470 = vld [vmem:[%s19 + $0x10] sm:$0xff]
      %v1471 = vld [vmem:[%s19 + $0x18] sm:$0xff]
      %v1472 = vld [vmem:[%s19 + $0x20] sm:$0xff]
      %v1473 = vld [vmem:[%s19 + $0x28] sm:$0xff]
      %v1474 = vld [vmem:[%s19 + $0x30] sm:$0xff]
      %v1475 = vld [vmem:[%s19 + $0x38] sm:$0xff]
      %v1476 = vld [vmem:[%s19 + $0x40] sm:$0xff]
      %v1477 = vld [vmem:[%s19 + $0x48] sm:$0xff]
      %v1478 = vld [vmem:[%s19 + $0x50] sm:$0xff]
      %v1479 = vld [vmem:[%s19 + $0x58] sm:$0xff]
      %1481 = vset.pattern.permute.xlu0 0
      %1482 = vperm.xlu0 %1481, %v1468
      %v1483 = vpop.permute.xlu0 %1482
      %1486 = vset.pattern.permute.xlu0 0
      %1487 = vperm.xlu0 %1486, %v1469
      %v1488 = vpop.permute.xlu0 %1487
      %1491 = vset.pattern.permute.xlu0 0
      %1492 = vperm.xlu0 %1491, %v1470
      %v1493 = vpop.permute.xlu0 %1492
      %1496 = vset.pattern.permute.xlu0 0
      %1497 = vperm.xlu0 %1496, %v1471
      %v1498 = vpop.permute.xlu0 %1497
      %v1501 = vsel %vm1000, %v1456, 0
      %v1504 = vsel %vm1000, %v1457, 0
      %v1507 = vsel %vm1000, %v1458, 0
      %v1510 = vsel %vm1000, %v1459, 0
      %1512 = vmatpush.msra.mxu0 0.0
      %1513 = vmatpush.msra.mxu0 0.0
      %1514 = vmatpush.msra.mxu0 0.0
      %1515 = vmatpush.msra.mxu0 0.0
      %1516 = vmatpush.msra.mxu0 0.0
      %1517 = vmatpush.msra.mxu0 0.0
      %1518 = vmatpush.msra.mxu0 0.0
      %1519 = vmatpush.msra.mxu0 0.0
      %1520 = vmatpush.msra.mxu0 0.0
      %1521 = vmatpush.msra.mxu0 0.0
      %1522 = vmatpush.msra.mxu0 0.0
      %1523 = vmatpush.msra.mxu0 0.0
      %1524 = vmatpush.msra.mxu0 %v1443
      %1525 = vmatpush.msra.mxu0 %v1442
      %1526 = vmatpush.msra.mxu0 %v1441
      %1527 = vmatpush.msra.mxu0 %v1440
      %1528 = vmatmul.f32.gmra.mxu0 %v1501
      %v1529 = vpop.f32.mrf.mxu0
      %v1530 = vadd.f32 %v1483, %v1529
      %1531 = vmatmul.f32.gmra.mxu0 %v1504
      %v1532 = vpop.f32.mrf.mxu0
      %v1533 = vadd.f32 %v1488, %v1532
      %1534 = vmatmul.f32.gmra.mxu0 %v1507
      %v1535 = vpop.f32.mrf.mxu0
      %v1536 = vadd.f32 %v1493, %v1535
      %1537 = vmatmul.f32.gmra.mxu0 %v1510
      %v1538 = vpop.f32.mrf.mxu0
      %v1539 = vadd.f32 %v1498, %v1538
      %1540 = vdwg.mxu0
      %1542 = vset.pattern.permute.xlu0 0
      %1543 = vperm.xlu0 %1542, %v1472
      %v1544 = vpop.permute.xlu0 %1543
      %1547 = vset.pattern.permute.xlu0 0
      %1548 = vperm.xlu0 %1547, %v1473
      %v1549 = vpop.permute.xlu0 %1548
      %1552 = vset.pattern.permute.xlu0 0
      %1553 = vperm.xlu0 %1552, %v1474
      %v1554 = vpop.permute.xlu0 %1553
      %1557 = vset.pattern.permute.xlu0 0
      %1558 = vperm.xlu0 %1557, %v1475
      %v1559 = vpop.permute.xlu0 %1558
      %v1562 = vsel %vm1000, %v1460, 0
      %v1565 = vsel %vm1000, %v1461, 0
      %v1568 = vsel %vm1000, %v1462, 0
      %v1571 = vsel %vm1000, %v1463, 0
      %1573 = vmatpush.msra.mxu0 0.0
      %1574 = vmatpush.msra.mxu0 0.0
      %1575 = vmatpush.msra.mxu0 0.0
      %1576 = vmatpush.msra.mxu0 0.0
      %1577 = vmatpush.msra.mxu0 0.0
      %1578 = vmatpush.msra.mxu0 0.0
      %1579 = vmatpush.msra.mxu0 0.0
      %1580 = vmatpush.msra.mxu0 0.0
      %1581 = vmatpush.msra.mxu0 0.0
      %1582 = vmatpush.msra.mxu0 0.0
      %1583 = vmatpush.msra.mxu0 0.0
      %1584 = vmatpush.msra.mxu0 0.0
      %1585 = vmatpush.msra.mxu0 %v1447
      %1586 = vmatpush.msra.mxu0 %v1446
      %1587 = vmatpush.msra.mxu0 %v1445
      %1588 = vmatpush.msra.mxu0 %v1444
      %1589 = vmatmul.f32.gmra.mxu0 %v1562
      %v1590 = vpop.f32.mrf.mxu0
      %v1591 = vadd.f32 %v1544, %v1590
      %1592 = vmatmul.f32.gmra.mxu0 %v1565
      %v1593 = vpop.f32.mrf.mxu0
      %v1594 = vadd.f32 %v1549, %v1593
      %1595 = vmatmul.f32.gmra.mxu0 %v1568
      %v1596 = vpop.f32.mrf.mxu0
      %v1597 = vadd.f32 %v1554, %v1596
      %1598 = vmatmul.f32.gmra.mxu0 %v1571
      %v1599 = vpop.f32.mrf.mxu0
      %v1600 = vadd.f32 %v1559, %v1599
      %1601 = vdwg.mxu0
      %1603 = vset.pattern.permute.xlu0 0
      %1604 = vperm.xlu0 %1603, %v1476
      %v1605 = vpop.permute.xlu0 %1604
      %1608 = vset.pattern.permute.xlu0 0
      %1609 = vperm.xlu0 %1608, %v1477
      %v1610 = vpop.permute.xlu0 %1609
      %1613 = vset.pattern.permute.xlu0 0
      %1614 = vperm.xlu0 %1613, %v1478
      %v1615 = vpop.permute.xlu0 %1614
      %1618 = vset.pattern.permute.xlu0 0
      %1619 = vperm.xlu0 %1618, %v1479
      %v1620 = vpop.permute.xlu0 %1619
      %v1623 = vsel %vm1000, %v1464, 0
      %v1626 = vsel %vm1000, %v1465, 0
      %v1629 = vsel %vm1000, %v1466, 0
      %v1632 = vsel %vm1000, %v1467, 0
      %1634 = vmatpush.msra.mxu0 0.0
      %1635 = vmatpush.msra.mxu0 0.0
      %1636 = vmatpush.msra.mxu0 0.0
      %1637 = vmatpush.msra.mxu0 0.0
      %1638 = vmatpush.msra.mxu0 0.0
      %1639 = vmatpush.msra.mxu0 0.0
      %1640 = vmatpush.msra.mxu0 0.0
      %1641 = vmatpush.msra.mxu0 0.0
      %1642 = vmatpush.msra.mxu0 0.0
      %1643 = vmatpush.msra.mxu0 0.0
      %1644 = vmatpush.msra.mxu0 0.0
      %1645 = vmatpush.msra.mxu0 0.0
      %1646 = vmatpush.msra.mxu0 %v1439
      %1647 = vmatpush.msra.mxu0 %v1438
      %1648 = vmatpush.msra.mxu0 %v1437
      %1649 = vmatpush.msra.mxu0 %v1436
      %1650 = vmatmul.f32.gmra.mxu0 %v1623
      %v1651 = vpop.f32.mrf.mxu0
      %v1652 = vadd.f32 %v1605, %v1651
      %1653 = vmatmul.f32.gmra.mxu0 %v1626
      %v1654 = vpop.f32.mrf.mxu0
      %v1655 = vadd.f32 %v1610, %v1654
      %1656 = vmatmul.f32.gmra.mxu0 %v1629
      %v1657 = vpop.f32.mrf.mxu0
      %v1658 = vadd.f32 %v1615, %v1657
      %1659 = vmatmul.f32.gmra.mxu0 %v1632
      %v1660 = vpop.f32.mrf.mxu0
      %v1661 = vadd.f32 %v1620, %v1660
      %1662 = vdwg.mxu0
      %1663 = vxpose.xlu0.b32.start [1/16] %v1591, 128
      %1664 = vxpose.xlu0.b32.cont [2/16] %v1594, 128
      %1665 = vxpose.xlu0.b32.cont [3/16] %v1597, 128
      %1666 = vxpose.xlu0.b32.cont [4/16] %v1600, 128
      %1667 = vxpose.xlu0.b32.cont [5/16] 0.0, 128
      %1668 = vxpose.xlu0.b32.cont [6/16] 0.0, 128
      %1669 = vxpose.xlu0.b32.cont [7/16] 0.0, 128
      %1670 = vxpose.xlu0.b32.cont [8/16] 0.0, 128
      %1671 = vxpose.xlu0.b32.cont [9/16] 0.0, 128
      %1672 = vxpose.xlu0.b32.cont [10/16] 0.0, 128
      %1673 = vxpose.xlu0.b32.cont [11/16] 0.0, 128
      %1674 = vxpose.xlu0.b32.cont [12/16] 0.0, 128
      %1675 = vxpose.xlu0.b32.cont [13/16] 0.0, 128
      %1676 = vxpose.xlu0.b32.cont [14/16] 0.0, 128
      %1677 = vxpose.xlu0.b32.cont [15/16] 0.0, 128
      %1678 = vxpose.xlu0.b32.end [16/16] 0.0, 128
      %v1679 = vpop.trf.xlu0
      %v1680 = vpop.trf.xlu0
      %v1681 = vpop.trf.xlu0
      %v1682 = vpop.trf.xlu0
      %v1683 = vpop.trf.xlu0
      %v1684 = vpop.trf.xlu0
      %v1685 = vpop.trf.xlu0
      %v1686 = vpop.trf.xlu0
      %v1687 = vpop.trf.xlu0
      %v1688 = vpop.trf.xlu0
      %v1689 = vpop.trf.xlu0
      %v1690 = vpop.trf.xlu0
      %v1691 = vpop.trf.xlu0
      %v1692 = vpop.trf.xlu0
      %v1693 = vpop.trf.xlu0
      %v1694 = vpop.trf.xlu0
      %v1696 = vsel %vm1000, %v1679, 0
      %1698 = vmatpush.msra.mxu0 0.0
      %1699 = vmatpush.msra.mxu0 0.0
      %1700 = vmatpush.msra.mxu0 0.0
      %1701 = vmatpush.msra.mxu0 0.0
      %1702 = vmatpush.msra.mxu0 0.0
      %1703 = vmatpush.msra.mxu0 0.0
      %1704 = vmatpush.msra.mxu0 0.0
      %1705 = vmatpush.msra.mxu0 0.0
      %1706 = vmatpush.msra.mxu0 0.0
      %1707 = vmatpush.msra.mxu0 0.0
      %1708 = vmatpush.msra.mxu0 0.0
      %1709 = vmatpush.msra.mxu0 0.0
      %1710 = vmatpush.msra.mxu0 %v1539
      %1711 = vmatpush.msra.mxu0 %v1536
      %1712 = vmatpush.msra.mxu0 %v1533
      %1713 = vmatpush.msra.mxu0 %v1530
      %1714 = vmatmul.f32.gmra.mxu0 %v1696
      %v1715 = vpop.f32.mrf.mxu0
      %v1716 = vadd.f32 0.0, %v1715
      %1717 = vdwg.mxu0
      %vm1718 = vcmask 64512
      %v1719 = vsel %vm1718, %v1716, -inf
      %v1720 = vrot.slane %v1719, 4
      %v1721 = vmax.f32 %v1719, %v1720
      %v1722 = vrot.slane %v1721, 2
      %v1723 = vmax.f32 %v1721, %v1722
      %v1724 = vrot.slane %v1723, 1
      %v1725 = vmax.f32 %v1723, %v1724
      %v1726 = vsub.f32 %v1716, %v1725
      %v1727 = vmul.f32 %v1726, 1.442695
      %v1728 = vpow.pop %v1727
      %v1729 = vsel %vm1718, %v1728, 0.0
      %v1730 = vrot.slane %v1729, 4
      %v1731 = vadd.f32 %v1729, %v1730
      %v1732 = vrot.slane %v1731, 2
      %v1733 = vadd.f32 %v1731, %v1732
      %v1734 = vrot.slane %v1733, 1
      %v1735 = vadd.f32 %v1733, %v1734
      %v1736 = vrcp.pop %v1735
      %v1737 = vmul.f32 %v1735, %v1736
      %v1738 = vsub.f32 1.0, %v1737
      %v1739 = vmul.f32 %v1736, %v1738
      %v1740 = vadd.f32 %v1736, %v1739
      %vm1741 = vweird.f32 %v1735
      %vm1742 = vweird.f32 %v1736
      %vm1743 = vmor %vm1741, %vm1742
      %v1744 = vsel %vm1743, %v1736, %v1740
      %v1745 = vand.u32 2147483647, %v1735
      %vm1746 = vcmp.eq.f32.partialorder %v1745, 8.507059e+37
      %v1747 = vand.u32 %v1735, 2147483648
      %v1748 = vor.u32 1.1754944e-38, %v1747
      %v1749 = vsel %vm1746, %v1748, %v1744
      %v1750 = vmul.f32 %v1728, %v1749
      %v1751 = vmul.f32 %v1652, %v1652
      %v1752 = vmul.f32 %v1655, %v1655
      %v1753 = vmul.f32 %v1658, %v1658
      %v1754 = vmul.f32 %v1661, %v1661
      %v1755 = vpack.c.bf16 %v1655, %v1652
      %v1756 = vpack.c.bf16 %v1661, %v1658
      %v1757 = vpack.c.bf16 %v1752, %v1751
      %v1758 = vpack.c.bf16 %v1754, %v1753
      %v1759 = vpack.c.bf16 %v1750, %v1750
      %v1761 = vsel %vm1718, %v1755, 0
      %v1764 = vsel %vm1718, %v1756, 0
      %v1767 = vsel %vm1718, %v1757, 0
      %v1770 = vsel %vm1718, %v1758, 0
      %vm1772 = vcmask 1043456
      %v1774 = vsel %vm1772, %v1759, 0
      %1776 = vmatpush.bf16.msra.mxu0 0
      %1777 = vmatpush.bf16.msra.mxu0 0
      %1778 = vmatpush.bf16.msra.mxu0 0
      %1779 = vmatpush.bf16.msra.mxu0 0
      %1780 = vmatpush.bf16.msra.mxu0 0
      %1781 = vmatpush.bf16.msra.mxu0 0
      %1782 = vmatpush.bf16.msra.mxu0 0
      %1783 = vmatpush.bf16.msra.mxu0 %v1774
      %1784 = vmatmul.bf16.gmra.mxu0 %v1761
      %v1785 = vpop.f32.mrf.mxu0
      %v1786 = vadd.f32 0.0, %v1785
      %v1787 = vpop.f32.mrf.mxu0
      %v1788 = vadd.f32 0.0, %v1787
      %1789 = vmatmul.bf16.gmra.mxu0 %v1764
      %v1790 = vpop.f32.mrf.mxu0
      %v1791 = vadd.f32 0.0, %v1790
      %v1792 = vpop.f32.mrf.mxu0
      %v1793 = vadd.f32 0.0, %v1792
      %1794 = vmatmul.bf16.gmra.mxu0 %v1767
      %v1795 = vpop.f32.mrf.mxu0
      %v1796 = vadd.f32 0.0, %v1795
      %v1797 = vpop.f32.mrf.mxu0
      %v1798 = vadd.f32 0.0, %v1797
      %1799 = vmatmul.bf16.gmra.mxu0 %v1770
      %v1800 = vpop.f32.mrf.mxu0
      %v1801 = vadd.f32 0.0, %v1800
      %v1802 = vpop.f32.mrf.mxu0
      %v1803 = vadd.f32 0.0, %v1802
      %1804 = vdwg.mxu0
      %v1805 = vmul.f32 %v1786, %v1786
      %v1806 = vmul.f32 %v1788, %v1788
      %v1807 = vmul.f32 %v1791, %v1791
      %v1808 = vmul.f32 %v1793, %v1793
      %v1809 = vsub.f32 %v1796, %v1805
      %v1810 = vsub.f32 %v1798, %v1806
      %v1811 = vsub.f32 %v1801, %v1807
      %v1812 = vsub.f32 %v1803, %v1808
      %v1813 = vmax.f32 %v1809, 0.0
      %v1814 = vmax.f32 %v1810, 0.0
      %v1815 = vmax.f32 %v1811, 0.0
      %v1816 = vmax.f32 %v1812, 0.0
      %v1817 = vrsqrt.pop %v1813
      %v1818 = vmul.f32 %v1817, %v1813
      %v1819 = vmul.f32 %v1818, %v1817
      %v1820 = vmul.f32 0.5, %v1819
      %v1821 = vsub.f32 1.5, %v1820
      %v1822 = vmul.f32 %v1817, %v1821
      %v1823 = vmul.f32 %v1813, %v1822
      %vm1824 = vcmp.eq.f32.partialorder %v1813, inf
      %v1825 = vsel %vm1824, %v1813, %v1823
      %vm1826 = vcmp.eq.f32.partialorder %v1813, 0.0
      %v1827 = vand.u32 %v1813, 2147483648
      %v1828 = vsel %vm1826, %v1827, %v1825
      %v1829 = vrsqrt.pop %v1814
      %v1830 = vmul.f32 %v1829, %v1814
      %v1831 = vmul.f32 %v1830, %v1829
      %v1832 = vmul.f32 0.5, %v1831
      %v1833 = vsub.f32 1.5, %v1832
      %v1834 = vmul.f32 %v1829, %v1833
      %v1835 = vmul.f32 %v1814, %v1834
      %vm1836 = vcmp.eq.f32.partialorder %v1814, inf
      %v1837 = vsel %vm1836, %v1814, %v1835
      %vm1838 = vcmp.eq.f32.partialorder %v1814, 0.0
      %v1839 = vand.u32 %v1814, 2147483648
      %v1840 = vsel %vm1838, %v1839, %v1837
      %v1841 = vrsqrt.pop %v1815
      %v1842 = vmul.f32 %v1841, %v1815
      %v1843 = vmul.f32 %v1842, %v1841
      %v1844 = vmul.f32 0.5, %v1843
      %v1845 = vsub.f32 1.5, %v1844
      %v1846 = vmul.f32 %v1841, %v1845
      %v1847 = vmul.f32 %v1815, %v1846
      %vm1848 = vcmp.eq.f32.partialorder %v1815, inf
      %v1849 = vsel %vm1848, %v1815, %v1847
      %vm1850 = vcmp.eq.f32.partialorder %v1815, 0.0
      %v1851 = vand.u32 %v1815, 2147483648
      %v1852 = vsel %vm1850, %v1851, %v1849
      %v1853 = vrsqrt.pop %v1816
      %v1854 = vmul.f32 %v1853, %v1816
      %v1855 = vmul.f32 %v1854, %v1853
      %v1856 = vmul.f32 0.5, %v1855
      %v1857 = vsub.f32 1.5, %v1856
      %v1858 = vmul.f32 %v1853, %v1857
      %v1859 = vmul.f32 %v1816, %v1858
      %vm1860 = vcmp.eq.f32.partialorder %v1816, inf
      %v1861 = vsel %vm1860, %v1816, %v1859
      %vm1862 = vcmp.eq.f32.partialorder %v1816, 0.0
      %v1863 = vand.u32 %v1816, 2147483648
      %v1864 = vsel %vm1862, %v1863, %v1861
      %1866 = vset.pattern.permute.xlu0 0
      %1867 = vperm.xlu0 %1866, %v1448
      %v1868 = vpop.permute.xlu0 %1867
      %1871 = vset.pattern.permute.xlu0 0
      %1872 = vperm.xlu0 %1871, %v1449
      %v1873 = vpop.permute.xlu0 %1872
      %1876 = vset.pattern.permute.xlu0 0
      %1877 = vperm.xlu0 %1876, %v1450
      %v1878 = vpop.permute.xlu0 %1877
      %1881 = vset.pattern.permute.xlu0 0
      %1882 = vperm.xlu0 %1881, %v1451
      %v1883 = vpop.permute.xlu0 %1882
      %v1885 = vsub.f32 %v1432, %v1868
      %v1886 = vsub.f32 %v1433, %v1873
      %v1887 = vsub.f32 %v1434, %v1878
      %v1888 = vsub.f32 %v1435, %v1883
      %1890 = vset.pattern.permute.xlu0 0
      %1891 = vperm.xlu0 %1890, %v1452
      %v1892 = vpop.permute.xlu0 %1891
      %1895 = vset.pattern.permute.xlu0 0
      %1896 = vperm.xlu0 %1895, %v1453
      %v1897 = vpop.permute.xlu0 %1896
      %1900 = vset.pattern.permute.xlu0 0
      %1901 = vperm.xlu0 %1900, %v1454
      %v1902 = vpop.permute.xlu0 %1901
      %1905 = vset.pattern.permute.xlu0 0
      %1906 = vperm.xlu0 %1905, %v1455
      %v1907 = vpop.permute.xlu0 %1906
      %v1909 = vmul.f32 %v1885, %v1892
      %v1910 = vmul.f32 %v1886, %v1897
      %v1911 = vmul.f32 %v1887, %v1902
      %v1912 = vmul.f32 %v1888, %v1907
      %v1913 = vmul.f32 %v1828, %v1909
      %v1914 = vmul.f32 %v1840, %v1910
      %v1915 = vmul.f32 %v1852, %v1911
      %v1916 = vmul.f32 %v1864, %v1912
      %v1917 = vadd.f32 %v1913, %v1786
      %v1918 = vadd.f32 %v1914, %v1788
      %v1919 = vadd.f32 %v1915, %v1791
      %v1920 = vadd.f32 %v1916, %v1793
      %v1921 = vpack.c.bf16 %v1918, %v1917
      %v1922 = vpack.c.bf16 %v1920, %v1919
      %v1923 = vld [vmem:[%s20] sm:$0xf]
      %v1925 = vsel %vm1718, %v1921, 0
      %v1928 = vsel %vm1718, %v1922, 0
      %v1931 = vsel %vm1772, %v1923, 0
      %1933 = vmatpush.bf16.msra.mxu0 0
      %1934 = vmatpush.bf16.msra.mxu0 0
      %1935 = vmatpush.bf16.msra.mxu0 0
      %1936 = vmatpush.bf16.msra.mxu0 0
      %1937 = vmatpush.bf16.msra.mxu0 0
      %1938 = vmatpush.bf16.msra.mxu0 0
      %1939 = vmatpush.bf16.msra.mxu0 0
      %1940 = vmatpush.bf16.msra.mxu0 %v1931
      %1941 = vmatmul.bf16.gmra.mxu0 %v1925
      %v1942 = vpop.f32.mrf.mxu0
      %v1943 = vadd.f32 0.0, %v1942
      %v1944 = vpop.f32.mrf.mxu0
      %v1945 = vadd.f32 0.0, %v1944
      %1946 = vmatmul.bf16.gmra.mxu0 %v1928
      %v1947 = vpop.f32.mrf.mxu0
      %v1948 = vadd.f32 0.0, %v1947
      %v1949 = vpop.f32.mrf.mxu0
      %v1950 = vadd.f32 0.0, %v1949
      %1951 = vdwg.mxu0
      %v1952 = vadd.f32 %v1428, %v1943
      %v1953 = vadd.f32 %v1429, %v1945
      %v1954 = vadd.f32 %v1430, %v1948
      %v1955 = vadd.f32 %v1431, %v1950
      %v1956 = vpack.c.bf16 %v1952, %v1952
      %v1957 = vpack.c.bf16 %v1953, %v1953
      %v1958 = vpack.c.bf16 %v1954, %v1954
      %v1959 = vpack.c.bf16 %v1955, %v1955
      %v1964 = vunpack.c.l.b16 %v1956
      %v1965 = vunpack.c.l.b16 %v1957
      %v1966 = vunpack.c.l.b16 %v1958
      %v1967 = vunpack.c.l.b16 %v1959
      %v1968 = vpack.c.b16 %v1965, %v1964
      %v1969 = vpack.c.b16 %v1967, %v1966
      %1970 = vrot.lane.b32.xlu0 %v1968, 127
      %v1971 = vpop.permute.xlu0 %1970
      %1972 = vrot.lane.b32.xlu0 %v1969, 127
      %v1973 = vpop.permute.xlu0 %1972
      %1974 = vrot.lane.b32.xlu0 %v1968, 1
      %v1975 = vpop.permute.xlu0 %1974
      %1976 = vrot.lane.b32.xlu0 %v1969, 1
      %v1977 = vpop.permute.xlu0 %1976
      %vm1978 = vcmask 7168
      %v1981 = vsel %vm1978, %v1971, %v1975
      %v1985 = vsel %vm1978, %v1973, %v1977
      %vm1987 = vcmask 121856
      %v1988 = vsel %vm1987, %v1971, %v1975
      %v1990 = vsel %vm1987, %v1973, %v1977
      %v1992 = vld [vmem:[%s21] sm:$0xf]
      %v1993 = vld [vmem:[%s21 + $0x4] sm:$0xf]
      %v1994 = vld [vmem:[%s21 + $0x8] sm:$0xf]
      %v1995 = vld [vmem:[%s21 + $0xc] sm:$0xf]
      %v1996 = vld [vmem:[%s21 + $0x10] sm:$0xf]
      %v1997 = vld [vmem:[%s21 + $0x14] sm:$0xf]
      %v1998 = vld [vmem:[%s21 + $0x18] sm:$0xf]
      %v1999 = vld [vmem:[%s21 + $0x1c] sm:$0xf]
      %v2000 = vld [vmem:[%s21 + $0x20] sm:$0xf]
      %v2001 = vld [vmem:[%s21 + $0x24] sm:$0xf]
      %v2002 = vld [vmem:[%s21 + $0x28] sm:$0xf]
      %v2003 = vld [vmem:[%s21 + $0x2c] sm:$0xf]
      %v2008 = vunpack.c.l.b16 %v1996
      %v2009 = vunpack.c.l.b16 %v1997
      %v2010 = vunpack.c.l.b16 %v1998
      %v2011 = vunpack.c.l.b16 %v1999
      %v2012 = vpack.c.b16 %v2009, %v2008
      %v2013 = vpack.c.b16 %v2011, %v2010
      %v2017 = vsel %vm1000, %v2012, 0
      %v2020 = vsel %vm1000, %v2013, 0
      %2022 = vmatpush.bf16.msra.mxu0 0
      %2023 = vmatpush.bf16.msra.mxu0 0
      %2024 = vmatpush.bf16.msra.mxu0 0
      %2025 = vmatpush.bf16.msra.mxu0 0
      %2026 = vmatpush.bf16.msra.mxu0 0
      %2027 = vmatpush.bf16.msra.mxu0 0
      %2028 = vmatpush.bf16.msra.mxu0 %v1969
      %2029 = vmatpush.bf16.msra.mxu0 %v1968
      %2030 = vmatmul.bf16.gmra.mxu0 %v2017
      %v2031 = vpop.f32.mrf.mxu0
      %v2032 = vadd.f32 0.0, %v2031
      %v2033 = vpop.f32.mrf.mxu0
      %v2034 = vadd.f32 0.0, %v2033
      %2035 = vmatmul.bf16.gmra.mxu0 %v2020
      %v2036 = vpop.f32.mrf.mxu0
      %v2037 = vadd.f32 0.0, %v2036
      %v2038 = vpop.f32.mrf.mxu0
      %v2039 = vadd.f32 0.0, %v2038
      %2040 = vdwg.mxu0
      %v2045 = vunpack.c.l.b16 %v1992
      %v2046 = vunpack.c.l.b16 %v1993
      %v2047 = vunpack.c.l.b16 %v1994
      %v2048 = vunpack.c.l.b16 %v1995
      %v2049 = vpack.c.b16 %v2046, %v2045
      %v2050 = vpack.c.b16 %v2048, %v2047
      %v2052 = vsel %vm1000, %v2049, 0
      %v2055 = vsel %vm1000, %v2050, 0
      %2057 = vmatpush.bf16.msra.mxu0 0
      %2058 = vmatpush.bf16.msra.mxu0 0
      %2059 = vmatpush.bf16.msra.mxu0 0
      %2060 = vmatpush.bf16.msra.mxu0 0
      %2061 = vmatpush.bf16.msra.mxu0 0
      %2062 = vmatpush.bf16.msra.mxu0 0
      %2063 = vmatpush.bf16.msra.mxu0 %v1985
      %2064 = vmatpush.bf16.msra.mxu0 %v1981
      %2065 = vmatmul.bf16.gmra.mxu0 %v2052
      %v2066 = vpop.f32.mrf.mxu0
      %v2067 = vadd.f32 %v2032, %v2066
      %v2068 = vpop.f32.mrf.mxu0
      %v2069 = vadd.f32 %v2034, %v2068
      %2070 = vmatmul.bf16.gmra.mxu0 %v2055
      %v2071 = vpop.f32.mrf.mxu0
      %v2072 = vadd.f32 %v2037, %v2071
      %v2073 = vpop.f32.mrf.mxu0
      %v2074 = vadd.f32 %v2039, %v2073
      %2075 = vdwg.mxu0
      %v2080 = vunpack.c.l.b16 %v2000
      %v2081 = vunpack.c.l.b16 %v2001
      %v2082 = vunpack.c.l.b16 %v2002
      %v2083 = vunpack.c.l.b16 %v2003
      %v2084 = vpack.c.b16 %v2081, %v2080
      %v2085 = vpack.c.b16 %v2083, %v2082
      %v2087 = vsel %vm1000, %v2084, 0
      %v2090 = vsel %vm1000, %v2085, 0
      %2092 = vmatpush.bf16.msra.mxu0 0
      %2093 = vmatpush.bf16.msra.mxu0 0
      %2094 = vmatpush.bf16.msra.mxu0 0
      %2095 = vmatpush.bf16.msra.mxu0 0
      %2096 = vmatpush.bf16.msra.mxu0 0
      %2097 = vmatpush.bf16.msra.mxu0 0
      %2098 = vmatpush.bf16.msra.mxu0 %v1990
      %2099 = vmatpush.bf16.msra.mxu0 %v1988
      %2100 = vmatmul.bf16.gmra.mxu0 %v2087
      %v2101 = vpop.f32.mrf.mxu0
      %v2102 = vadd.f32 0.0, %v2101
      %v2103 = vpop.f32.mrf.mxu0
      %v2104 = vadd.f32 0.0, %v2103
      %2105 = vmatmul.bf16.gmra.mxu0 %v2090
      %v2106 = vpop.f32.mrf.mxu0
      %v2107 = vadd.f32 0.0, %v2106
      %v2108 = vpop.f32.mrf.mxu0
      %v2109 = vadd.f32 0.0, %v2108
      %2110 = vdwg.mxu0
      %v2111 = vadd.f32 %v2067, %v2102
      %v2112 = vadd.f32 %v2069, %v2104
      %v2113 = vadd.f32 %v2072, %v2107
      %v2114 = vadd.f32 %v2074, %v2109
      %v2115 = vld [vmem:[%s22] sm:$0xff]
      %v2116 = vld [vmem:[%s22 + $0x8] sm:$0xff]
      %v2117 = vld [vmem:[%s22 + $0x10] sm:$0xff]
      %v2118 = vld [vmem:[%s22 + $0x18] sm:$0xff]
      %2120 = vset.pattern.permute.xlu0 0
      %2121 = vperm.xlu0 %2120, %v2115
      %v2122 = vpop.permute.xlu0 %2121
      %2125 = vset.pattern.permute.xlu0 0
      %2126 = vperm.xlu0 %2125, %v2116
      %v2127 = vpop.permute.xlu0 %2126
      %2130 = vset.pattern.permute.xlu0 0
      %2131 = vperm.xlu0 %2130, %v2117
      %v2132 = vpop.permute.xlu0 %2131
      %2135 = vset.pattern.permute.xlu0 0
      %2136 = vperm.xlu0 %2135, %v2118
      %v2137 = vpop.permute.xlu0 %2136
      %v2139 = vadd.f32 %v2111, %v2122
      %v2140 = vadd.f32 %v2112, %v2127
      %v2141 = vadd.f32 %v2113, %v2132
      %v2142 = vadd.f32 %v2114, %v2137
      %2143 = vst.msk [vmem:[%s930] sm:$0xff] %vm1225, %v2139
      %2144 = vst.msk [vmem:[%s930 + $0x8] sm:$0xff] %vm1225, %v2140
      %2145 = vst.msk [vmem:[%s930 + $0x10] sm:$0xff] %vm1225, %v2141
      %2146 = vst.msk [vmem:[%s930 + $0x18] sm:$0xff] %vm1225, %v2142
      %p2147 = scmp.lt.s32.totalorder %s34, 1
      %s2148 = scalar_select %p2147, %s34, 1
      %s2149 = smul.addr %s2148, 4
      %s2150 = smul.addr %s2149, 8
      %s2151 = scalar_lea.vmem %s23, %s2150
      // Predicated region
      $region113: #{transformer_forward.1} parent=111 // pred_check
        %p2152 = pneg %p595
      $region114: #{transformer_forward.1} parent=111 // pred_check_branch
        %2154 = sbr.rel (%p2152) target = $region116
      $region115: #{transformer_forward.1} parent=111 // pred_region
        _
      $region116: #{transformer_forward.1} parent=111 // pred_fallthru
        _
    $region112: #{transformer_forward.1} parent=5 // pred_fallthru
      _
    %p2155 = scmp.le.s32.totalorder 2, %s29
    // Predicated region
    $region117: #{transformer_forward.1} parent=5 // pred_check
      %p2156 = pneg %p2155
    $region118: #{transformer_forward.1} parent=5 // pred_check_branch
      %2158 = sbr.rel (%p2156) target = $region120
    $region119: #{transformer_forward.1} parent=5 // pred_region
      %s2159 = ssub.s32 %s29, 2
      // Predicated region
      $region121: #{transformer_forward.1} parent=119 // pred_check
        %p2160 = pneg %p601
      $region122: #{transformer_forward.1} parent=119 // pred_check_branch
        %2162 = sbr.rel (%p2160) target = $region124
      $region123: #{transformer_forward.1} parent=119 // pred_region
        %p2163 = scmp.lt.s32.totalorder %s35, 1
        %s2164 = scalar_select %p2163, %s35, 1
        %s2165 = smul.addr %s2164, 4
        %s2166 = smul.addr %s2165, 8
        %s2167 = scalar_lea.vmem %s23, %s2166
      $region124: #{transformer_forward.1} parent=119 // pred_fallthru
        _
    $region120: #{transformer_forward.1} parent=5 // pred_fallthru
      _
  $region6: #{transformer_forward.1} parent=0 // loop_footer
    %s33 = sadd.s32 1, %s29
  $region7: #{transformer_forward.1} parent=0 // loop_footer_branch
    %28 = sbr.rel target = $region3
  $region8: #{transformer_forward.1} parent=0 // loop_exit
    _

</llo_original>
